<compile_context>
chip_gen: v7x
topology: tpu7x:2x2x1
jax: 0.10.0
libtpu: 0.0.40
codegen_flags: <defaults>
</compile_context>

<pallas_src>
import functools

import jax
import jax.numpy as jnp
from jax.experimental import pallas as pl
from jax.experimental.pallas import tpu as pltpu


def _attn_kernel(q_ref, k_ref, v_ref, o_ref, *, heads, head_dim, scale, tb, j_len):
    # q_ref: (1,  N, heads*d)   Q is broadcast over batch
    # k_ref: (tb, J, heads*d)
    # v_ref: (tb, J, heads*d)
    # o_ref: (tb, N, heads*d)
    q = q_ref[0]                                                  # (N, H*d)

    # Flatten the batch block into the sublane axis once, so each head's QK^T
    # is a single wide MXU contraction covering every batch element in the
    # block (contraction depth d, RHS width tb*J) instead of tb tiny matmuls.
    k_flat = k_ref[...].reshape(tb * j_len, heads * head_dim)     # (tb*J, H*d)

    for h in range(heads):                         # static -> unrolled
        lo = h * head_dim
        q_h = q[:, lo:lo + head_dim]               # (N, d), input dtype
        k_h = k_flat[:, lo:lo + head_dim]          # (tb*J, d)

        # scores for all tb batch elements at once: (N, tb*J), f32 accumulation
        # on the MXU, no materialized K^T.
        dots = jax.lax.dot_general(
            q_h, k_h,
            dimension_numbers=(((1,), (1,)), ((), ())),
            preferred_element_type=jnp.float32)

        for b in range(tb):                        # static -> unrolled
            s = dots[:, b * j_len:(b + 1) * j_len]                 # (N, J)
            m = jnp.max(s, axis=-1, keepdims=True)
            # softmax(scale*s): scale folded into the f32 exp argument
            # (numerically equivalent, no pre-matmul rounding of Q).
            p = jnp.exp((s - m) * scale)
            denom = jnp.sum(p, axis=-1, keepdims=True)
            attn = (p * pl.reciprocal(denom, approx=True)).astype(v_ref.dtype)

            v_bh = v_ref[b, :, lo:lo + head_dim]                   # (J, d)
            out = jnp.dot(attn, v_bh, preferred_element_type=jnp.float32)

            # Direct per-(batch, head) store; ends this head's live ranges.
            o_ref[b, :, lo:lo + head_dim] = out.astype(o_ref.dtype)


def broad_multi_head_attention(Q, K, V, *, dim, heads, batch_block=8):
    """Pallas equivalent of BroadMultiHeadAttention.forward.

    Q: (1, N, heads*d)   K, V: (B, J, heads*d)   returns (B, N, heads*d)
    """
    assert dim % heads == 0
    head_dim = dim // heads
    scale = float((dim / heads) ** (-0.5))

    N = Q.shape[1]
    B, J, _ = K.shape

    # Largest block <= batch_block that divides B, so every grid step does a
    # full block of work (amortizes per-step overhead, widens DMAs/stores).
    tb = max(1, min(batch_block, B))
    while B % tb:
        tb -= 1

    kernel = functools.partial(
        _attn_kernel, heads=heads, head_dim=head_dim, scale=scale,
        tb=tb, j_len=J)

    itemsize = jnp.dtype(Q.dtype).itemsize
    flops = 4 * B * heads * N * J * head_dim          # QK^T + attn@V
    transcendentals = B * heads * N * J               # exp
    bytes_accessed = (Q.size + K.size + V.size + B * N * dim) * itemsize

    # TODO(synk): for production N, add a second parallel grid axis over N
    # tiles so both v7x TensorCores get work even when B // tb == 1.
    # TODO(synk): for production J, add an innermost "arbitrary" J grid axis
    # with an online softmax (running max/sum in VMEM scratch), size the J
    # tile against v7x's 64 MiB VMEM (not v5e/v6e's 128 MiB), mask padded keys
    # to -inf, and consider pipeline_mode=pl.Buffered(3) on K/V for v5e.
    return pl.pallas_call(
        kernel,
        out_shape=jax.ShapeDtypeStruct((B, N, dim), Q.dtype),
        grid_spec=pltpu.PrefetchScalarGridSpec(
            num_scalar_prefetch=0,
            grid=(B // tb,),                                        # batch blocks
            in_specs=[
                pl.BlockSpec((1, N, dim), lambda i: (0, 0, 0)),     # Q shared
                pl.BlockSpec((tb, J, dim), lambda i: (i, 0, 0)),    # K block
                pl.BlockSpec((tb, J, dim), lambda i: (i, 0, 0)),    # V block
            ],
            out_specs=pl.BlockSpec((tb, N, dim), lambda i: (i, 0, 0)),
        ),
        compiler_params=pltpu.CompilerParams(
            dimension_semantics=("parallel",),
        ),
        cost_estimate=pl.CostEstimate(
            flops=flops,
            transcendentals=transcendentals,
            bytes_accessed=bytes_accessed),
    )(Q, K, V)


def _reference(Q, K, V, *, dim, heads):
    """Pure-JAX reference mirroring the torch module exactly."""
    d = dim // heads
    scale = (dim / heads) ** (-0.5)
    N = Q.shape[1]
    B, J, _ = K.shape
    q = jnp.squeeze(Q, axis=0).reshape(N, heads, d).transpose(1, 0, 2)   # (h, i, d)
    k = K.reshape(B, J, heads, d).transpose(0, 2, 1, 3)                  # (b, h, j, d)
    v = V.reshape(B, J, heads, d).transpose(0, 2, 1, 3)                  # (b, h, j, d)
    dots = jnp.einsum('hid,bhjd->bhij', q, k) * scale
    attn = jax.nn.softmax(dots, axis=-1)
    out = jnp.einsum('bhij,bhjd->bhid', attn, v)
    return out.transpose(0, 2, 1, 3).reshape(B, N, heads * d)


if __name__ == "__main__":
    # Small shapes consistent with the module: dim=32, heads=4 -> d=8.
    dim, heads = 32, 4
    B, N, J = 2, 8, 8

    key = jax.random.PRNGKey(0)
    kq, kk, kv = jax.random.split(key, 3)
    Q = jax.random.normal(kq, (1, N, dim), dtype=jnp.float32)
    K = jax.random.normal(kk, (B, J, dim), dtype=jnp.float32)
    V = jax.random.normal(kv, (B, J, dim), dtype=jnp.float32)

    out = broad_multi_head_attention(Q, K, V, dim=dim, heads=heads)
    out = jax.block_until_ready(out)

    ref = _reference(Q, K, V, dim=dim, heads=heads)
    assert out.shape == (B, N, dim), out.shape
    # Tolerance loosened slightly vs exact softmax because the kernel uses the
    # EUP approximate reciprocal for the softmax denominator.
    assert jnp.allclose(out, ref, atol=2e-3, rtol=2e-3), "mismatch vs reference"

    print("KERNEL_OK")
</pallas_src>

<mosaic_0001>
module attributes {stable_mosaic.version = 11 : i64} {
  func.func @_attn_kernel(%arg0: i32, %arg1: memref<1x8x32xf32, #tpu.memory_space<vmem>>, %arg2: memref<2x8x32xf32, #tpu.memory_space<vmem>>, %arg3: memref<2x8x32xf32, #tpu.memory_space<vmem>>, %arg4: memref<2x8x32xf32, #tpu.memory_space<vmem>>) attributes {dimension_semantics = [#tpu.dimension_semantics<parallel>], iteration_bounds = array<i64: 1>, scalar_prefetch = 0 : i64, scratch_operands = 0 : i64, tpu.core_type = #tpu.core_type<tc>, window_params = [{pipeline_mode = #tpu.pipeline_mode<synchronous>, transform_indices = @transform_0, window_bounds = array<i64: 1, 8, 32>}, {transform_indices = @transform_1, window_bounds = array<i64: 2, 8, 32>}, {transform_indices = @transform_2, window_bounds = array<i64: 2, 8, 32>}, {transform_indices = @transform_3, window_bounds = array<i64: 2, 8, 32>}]} {
    %c0 = arith.constant 0 : index
    %c0_0 = arith.constant 0 : index
    %c0_1 = arith.constant 0 : index
    %0 = vector.load %arg1[%c0, %c0_0, %c0_1] : memref<1x8x32xf32, #tpu.memory_space<vmem>>, vector<1x8x32xf32>
    %1 = vector.shape_cast %0 : vector<1x8x32xf32> to vector<8x32xf32>
    %c0_2 = arith.constant 0 : index
    %c0_3 = arith.constant 0 : index
    %c0_4 = arith.constant 0 : index
    %2 = vector.load %arg2[%c0_2, %c0_3, %c0_4] : memref<2x8x32xf32, #tpu.memory_space<vmem>>, vector<2x8x32xf32>
    %3 = vector.shape_cast %2 : vector<2x8x32xf32> to vector<16x32xf32>
    %4 = vector.extract_strided_slice %1 {offsets = [0, 0], sizes = [8, 8], strides = [1, 1]} : vector<8x32xf32> to vector<8x8xf32>
    %5 = vector.extract_strided_slice %3 {offsets = [0, 0], sizes = [16, 8], strides = [1, 1]} : vector<16x32xf32> to vector<16x8xf32>
    %cst = arith.constant dense<0.000000e+00> : vector<8x16xf32>
    %6 = tpu.matmul %4, %5, %cst {dimension_numbers = #tpu.dot_dimension_numbers<[1], [1], [0], [0], [0, 0, 1, 0], [], []>} : vector<8x8xf32>, vector<16x8xf32>, vector<8x16xf32> -> vector<8x16xf32>
    %7 = vector.extract_strided_slice %6 {offsets = [0, 0], sizes = [8, 8], strides = [1, 1]} : vector<8x16xf32> to vector<8x8xf32>
    %cst_5 = arith.constant dense<0xFF800000> : vector<8xf32>
    %8 = vector.multi_reduction <maximumf>, %7, %cst_5 [1] : vector<8x8xf32> to vector<8xf32>
    %9 = vector.shape_cast %8 : vector<8xf32> to vector<8x1xf32>
    %10 = vector.broadcast %9 : vector<8x1xf32> to vector<8x8xf32>
    %11 = arith.subf %7, %10 : vector<8x8xf32>
    %cst_6 = arith.constant 0.353553385 : f32
    %12 = vector.broadcast %cst_6 : f32 to vector<8x8xf32>
    %13 = arith.mulf %11, %12 : vector<8x8xf32>
    %14 = math.exp %13 : vector<8x8xf32>
    %cst_7 = arith.constant dense<0.000000e+00> : vector<8xf32>
    %15 = vector.multi_reduction <add>, %14, %cst_7 [1] : vector<8x8xf32> to vector<8xf32>
    %16 = vector.shape_cast %15 : vector<8xf32> to vector<8x1xf32>
    %17 = tpu.reciprocal %16 {approx = true} : vector<8x1xf32> -> vector<8x1xf32>
    %18 = vector.broadcast %17 : vector<8x1xf32> to vector<8x8xf32>
    %19 = arith.mulf %14, %18 : vector<8x8xf32>
    %c0_8 = arith.constant 0 : index
    %c0_9 = arith.constant 0 : index
    %c0_10 = arith.constant 0 : index
    %20 = vector.load %arg3[%c0_8, %c0_9, %c0_10] : memref<2x8x32xf32, #tpu.memory_space<vmem>>, vector<1x8x8xf32>
    %21 = vector.shape_cast %20 : vector<1x8x8xf32> to vector<8x8xf32>
    %cst_11 = arith.constant dense<0.000000e+00> : vector<8x8xf32>
    %22 = tpu.matmul %19, %21, %cst_11 {dimension_numbers = #tpu.dot_dimension_numbers<[1], [0], [0], [1], [0, 0, 1, 1], [], []>} : vector<8x8xf32>, vector<8x8xf32>, vector<8x8xf32> -> vector<8x8xf32>
    %c0_12 = arith.constant 0 : index
    %c0_13 = arith.constant 0 : index
    %c0_14 = arith.constant 0 : index
    %23 = vector.load %arg4[%c0_12, %c0_13, %c0_14] : memref<2x8x32xf32, #tpu.memory_space<vmem>>, vector<1x8x8xf32>
    %24 = vector.shape_cast %23 : vector<1x8x8xf32> to vector<8x8xf32>
    %25 = vector.shape_cast %22 : vector<8x8xf32> to vector<1x8x8xf32>
    tpu.vector_store %arg4[%c0_12, %c0_13, %c0_14], %25 {strides = array<i32>} : memref<2x8x32xf32, #tpu.memory_space<vmem>>, vector<1x8x8xf32>,
    %26 = vector.extract_strided_slice %6 {offsets = [0, 8], sizes = [8, 8], strides = [1, 1]} : vector<8x16xf32> to vector<8x8xf32>
    %cst_15 = arith.constant dense<0xFF800000> : vector<8xf32>
    %27 = vector.multi_reduction <maximumf>, %26, %cst_15 [1] : vector<8x8xf32> to vector<8xf32>
    %28 = vector.shape_cast %27 : vector<8xf32> to vector<8x1xf32>
    %29 = vector.broadcast %28 : vector<8x1xf32> to vector<8x8xf32>
    %30 = arith.subf %26, %29 : vector<8x8xf32>
    %cst_16 = arith.constant 0.353553385 : f32
    %31 = vector.broadcast %cst_16 : f32 to vector<8x8xf32>
    %32 = arith.mulf %30, %31 : vector<8x8xf32>
    %33 = math.exp %32 : vector<8x8xf32>
    %cst_17 = arith.constant dense<0.000000e+00> : vector<8xf32>
    %34 = vector.multi_reduction <add>, %33, %cst_17 [1] : vector<8x8xf32> to vector<8xf32>
    %35 = vector.shape_cast %34 : vector<8xf32> to vector<8x1xf32>
    %36 = tpu.reciprocal %35 {approx = true} : vector<8x1xf32> -> vector<8x1xf32>
    %37 = vector.broadcast %36 : vector<8x1xf32> to vector<8x8xf32>
    %38 = arith.mulf %33, %37 : vector<8x8xf32>
    %c1 = arith.constant 1 : index
    %c0_18 = arith.constant 0 : index
    %c0_19 = arith.constant 0 : index
    %39 = vector.load %arg3[%c1, %c0_18, %c0_19] : memref<2x8x32xf32, #tpu.memory_space<vmem>>, vector<1x8x8xf32>
    %40 = vector.shape_cast %39 : vector<1x8x8xf32> to vector<8x8xf32>
    %cst_20 = arith.constant dense<0.000000e+00> : vector<8x8xf32>
    %41 = tpu.matmul %38, %40, %cst_20 {dimension_numbers = #tpu.dot_dimension_numbers<[1], [0], [0], [1], [0, 0, 1, 1], [], []>} : vector<8x8xf32>, vector<8x8xf32>, vector<8x8xf32> -> vector<8x8xf32>
    %c1_21 = arith.constant 1 : index
    %c0_22 = arith.constant 0 : index
    %c0_23 = arith.constant 0 : index
    %42 = vector.load %arg4[%c1_21, %c0_22, %c0_23] : memref<2x8x32xf32, #tpu.memory_space<vmem>>, vector<1x8x8xf32>
    %43 = vector.shape_cast %42 : vector<1x8x8xf32> to vector<8x8xf32>
    %44 = vector.shape_cast %41 : vector<8x8xf32> to vector<1x8x8xf32>
    tpu.vector_store %arg4[%c1_21, %c0_22, %c0_23], %44 {strides = array<i32>} : memref<2x8x32xf32, #tpu.memory_space<vmem>>, vector<1x8x8xf32>,
    %45 = vector.extract_strided_slice %1 {offsets = [0, 8], sizes = [8, 8], strides = [1, 1]} : vector<8x32xf32> to vector<8x8xf32>
    %46 = vector.extract_strided_slice %3 {offsets = [0, 8], sizes = [16, 8], strides = [1, 1]} : vector<16x32xf32> to vector<16x8xf32>
    %cst_24 = arith.constant dense<0.000000e+00> : vector<8x16xf32>
    %47 = tpu.matmul %45, %46, %cst_24 {dimension_numbers = #tpu.dot_dimension_numbers<[1], [1], [0], [0], [0, 0, 1, 0], [], []>} : vector<8x8xf32>, vector<16x8xf32>, vector<8x16xf32> -> vector<8x16xf32>
    %48 = vector.extract_strided_slice %47 {offsets = [0, 0], sizes = [8, 8], strides = [1, 1]} : vector<8x16xf32> to vector<8x8xf32>
    %cst_25 = arith.constant dense<0xFF800000> : vector<8xf32>
    %49 = vector.multi_reduction <maximumf>, %48, %cst_25 [1] : vector<8x8xf32> to vector<8xf32>
    %50 = vector.shape_cast %49 : vector<8xf32> to vector<8x1xf32>
    %51 = vector.broadcast %50 : vector<8x1xf32> to vector<8x8xf32>
    %52 = arith.subf %48, %51 : vector<8x8xf32>
    %cst_26 = arith.constant 0.353553385 : f32
    %53 = vector.broadcast %cst_26 : f32 to vector<8x8xf32>
    %54 = arith.mulf %52, %53 : vector<8x8xf32>
    %55 = math.exp %54 : vector<8x8xf32>
    %cst_27 = arith.constant dense<0.000000e+00> : vector<8xf32>
    %56 = vector.multi_reduction <add>, %55, %cst_27 [1] : vector<8x8xf32> to vector<8xf32>
    %57 = vector.shape_cast %56 : vector<8xf32> to vector<8x1xf32>
    %58 = tpu.reciprocal %57 {approx = true} : vector<8x1xf32> -> vector<8x1xf32>
    %59 = vector.broadcast %58 : vector<8x1xf32> to vector<8x8xf32>
    %60 = arith.mulf %55, %59 : vector<8x8xf32>
    %c0_28 = arith.constant 0 : index
    %c0_29 = arith.constant 0 : index
    %c8 = arith.constant 8 : index
    %61 = vector.load %arg3[%c0_28, %c0_29, %c8] : memref<2x8x32xf32, #tpu.memory_space<vmem>>, vector<1x8x8xf32>
    %62 = vector.shape_cast %61 : vector<1x8x8xf32> to vector<8x8xf32>
    %cst_30 = arith.constant dense<0.000000e+00> : vector<8x8xf32>
    %63 = tpu.matmul %60, %62, %cst_30 {dimension_numbers = #tpu.dot_dimension_numbers<[1], [0], [0], [1], [0, 0, 1, 1], [], []>} : vector<8x8xf32>, vector<8x8xf32>, vector<8x8xf32> -> vector<8x8xf32>
    %c0_31 = arith.constant 0 : index
    %c0_32 = arith.constant 0 : index
    %c8_33 = arith.constant 8 : index
    %64 = vector.load %arg4[%c0_31, %c0_32, %c8_33] : memref<2x8x32xf32, #tpu.memory_space<vmem>>, vector<1x8x8xf32>
    %65 = vector.shape_cast %64 : vector<1x8x8xf32> to vector<8x8xf32>
    %66 = vector.shape_cast %63 : vector<8x8xf32> to vector<1x8x8xf32>
    tpu.vector_store %arg4[%c0_31, %c0_32, %c8_33], %66 {strides = array<i32>} : memref<2x8x32xf32, #tpu.memory_space<vmem>>, vector<1x8x8xf32>,
    %67 = vector.extract_strided_slice %47 {offsets = [0, 8], sizes = [8, 8], strides = [1, 1]} : vector<8x16xf32> to vector<8x8xf32>
    %cst_34 = arith.constant dense<0xFF800000> : vector<8xf32>
    %68 = vector.multi_reduction <maximumf>, %67, %cst_34 [1] : vector<8x8xf32> to vector<8xf32>
    %69 = vector.shape_cast %68 : vector<8xf32> to vector<8x1xf32>
    %70 = vector.broadcast %69 : vector<8x1xf32> to vector<8x8xf32>
    %71 = arith.subf %67, %70 : vector<8x8xf32>
    %cst_35 = arith.constant 0.353553385 : f32
    %72 = vector.broadcast %cst_35 : f32 to vector<8x8xf32>
    %73 = arith.mulf %71, %72 : vector<8x8xf32>
    %74 = math.exp %73 : vector<8x8xf32>
    %cst_36 = arith.constant dense<0.000000e+00> : vector<8xf32>
    %75 = vector.multi_reduction <add>, %74, %cst_36 [1] : vector<8x8xf32> to vector<8xf32>
    %76 = vector.shape_cast %75 : vector<8xf32> to vector<8x1xf32>
    %77 = tpu.reciprocal %76 {approx = true} : vector<8x1xf32> -> vector<8x1xf32>
    %78 = vector.broadcast %77 : vector<8x1xf32> to vector<8x8xf32>
    %79 = arith.mulf %74, %78 : vector<8x8xf32>
    %c1_37 = arith.constant 1 : index
    %c0_38 = arith.constant 0 : index
    %c8_39 = arith.constant 8 : index
    %80 = vector.load %arg3[%c1_37, %c0_38, %c8_39] : memref<2x8x32xf32, #tpu.memory_space<vmem>>, vector<1x8x8xf32>
    %81 = vector.shape_cast %80 : vector<1x8x8xf32> to vector<8x8xf32>
    %cst_40 = arith.constant dense<0.000000e+00> : vector<8x8xf32>
    %82 = tpu.matmul %79, %81, %cst_40 {dimension_numbers = #tpu.dot_dimension_numbers<[1], [0], [0], [1], [0, 0, 1, 1], [], []>} : vector<8x8xf32>, vector<8x8xf32>, vector<8x8xf32> -> vector<8x8xf32>
    %c1_41 = arith.constant 1 : index
    %c0_42 = arith.constant 0 : index
    %c8_43 = arith.constant 8 : index
    %83 = vector.load %arg4[%c1_41, %c0_42, %c8_43] : memref<2x8x32xf32, #tpu.memory_space<vmem>>, vector<1x8x8xf32>
    %84 = vector.shape_cast %83 : vector<1x8x8xf32> to vector<8x8xf32>
    %85 = vector.shape_cast %82 : vector<8x8xf32> to vector<1x8x8xf32>
    tpu.vector_store %arg4[%c1_41, %c0_42, %c8_43], %85 {strides = array<i32>} : memref<2x8x32xf32, #tpu.memory_space<vmem>>, vector<1x8x8xf32>,
    %86 = vector.extract_strided_slice %1 {offsets = [0, 16], sizes = [8, 8], strides = [1, 1]} : vector<8x32xf32> to vector<8x8xf32>
    %87 = vector.extract_strided_slice %3 {offsets = [0, 16], sizes = [16, 8], strides = [1, 1]} : vector<16x32xf32> to vector<16x8xf32>
    %cst_44 = arith.constant dense<0.000000e+00> : vector<8x16xf32>
    %88 = tpu.matmul %86, %87, %cst_44 {dimension_numbers = #tpu.dot_dimension_numbers<[1], [1], [0], [0], [0, 0, 1, 0], [], []>} : vector<8x8xf32>, vector<16x8xf32>, vector<8x16xf32> -> vector<8x16xf32>
    %89 = vector.extract_strided_slice %88 {offsets = [0, 0], sizes = [8, 8], strides = [1, 1]} : vector<8x16xf32> to vector<8x8xf32>
    %cst_45 = arith.constant dense<0xFF800000> : vector<8xf32>
    %90 = vector.multi_reduction <maximumf>, %89, %cst_45 [1] : vector<8x8xf32> to vector<8xf32>
    %91 = vector.shape_cast %90 : vector<8xf32> to vector<8x1xf32>
    %92 = vector.broadcast %91 : vector<8x1xf32> to vector<8x8xf32>
    %93 = arith.subf %89, %92 : vector<8x8xf32>
    %cst_46 = arith.constant 0.353553385 : f32
    %94 = vector.broadcast %cst_46 : f32 to vector<8x8xf32>
    %95 = arith.mulf %93, %94 : vector<8x8xf32>
    %96 = math.exp %95 : vector<8x8xf32>
    %cst_47 = arith.constant dense<0.000000e+00> : vector<8xf32>
    %97 = vector.multi_reduction <add>, %96, %cst_47 [1] : vector<8x8xf32> to vector<8xf32>
    %98 = vector.shape_cast %97 : vector<8xf32> to vector<8x1xf32>
    %99 = tpu.reciprocal %98 {approx = true} : vector<8x1xf32> -> vector<8x1xf32>
    %100 = vector.broadcast %99 : vector<8x1xf32> to vector<8x8xf32>
    %101 = arith.mulf %96, %100 : vector<8x8xf32>
    %c0_48 = arith.constant 0 : index
    %c0_49 = arith.constant 0 : index
    %c16 = arith.constant 16 : index
    %102 = vector.load %arg3[%c0_48, %c0_49, %c16] : memref<2x8x32xf32, #tpu.memory_space<vmem>>, vector<1x8x8xf32>
    %103 = vector.shape_cast %102 : vector<1x8x8xf32> to vector<8x8xf32>
    %cst_50 = arith.constant dense<0.000000e+00> : vector<8x8xf32>
    %104 = tpu.matmul %101, %103, %cst_50 {dimension_numbers = #tpu.dot_dimension_numbers<[1], [0], [0], [1], [0, 0, 1, 1], [], []>} : vector<8x8xf32>, vector<8x8xf32>, vector<8x8xf32> -> vector<8x8xf32>
    %c0_51 = arith.constant 0 : index
    %c0_52 = arith.constant 0 : index
    %c16_53 = arith.constant 16 : index
    %105 = vector.load %arg4[%c0_51, %c0_52, %c16_53] : memref<2x8x32xf32, #tpu.memory_space<vmem>>, vector<1x8x8xf32>
    %106 = vector.shape_cast %105 : vector<1x8x8xf32> to vector<8x8xf32>
    %107 = vector.shape_cast %104 : vector<8x8xf32> to vector<1x8x8xf32>
    tpu.vector_store %arg4[%c0_51, %c0_52, %c16_53], %107 {strides = array<i32>} : memref<2x8x32xf32, #tpu.memory_space<vmem>>, vector<1x8x8xf32>,
    %108 = vector.extract_strided_slice %88 {offsets = [0, 8], sizes = [8, 8], strides = [1, 1]} : vector<8x16xf32> to vector<8x8xf32>
    %cst_54 = arith.constant dense<0xFF800000> : vector<8xf32>
    %109 = vector.multi_reduction <maximumf>, %108, %cst_54 [1] : vector<8x8xf32> to vector<8xf32>
    %110 = vector.shape_cast %109 : vector<8xf32> to vector<8x1xf32>
    %111 = vector.broadcast %110 : vector<8x1xf32> to vector<8x8xf32>
    %112 = arith.subf %108, %111 : vector<8x8xf32>
    %cst_55 = arith.constant 0.353553385 : f32
    %113 = vector.broadcast %cst_55 : f32 to vector<8x8xf32>
    %114 = arith.mulf %112, %113 : vector<8x8xf32>
    %115 = math.exp %114 : vector<8x8xf32>
    %cst_56 = arith.constant dense<0.000000e+00> : vector<8xf32>
    %116 = vector.multi_reduction <add>, %115, %cst_56 [1] : vector<8x8xf32> to vector<8xf32>
    %117 = vector.shape_cast %116 : vector<8xf32> to vector<8x1xf32>
    %118 = tpu.reciprocal %117 {approx = true} : vector<8x1xf32> -> vector<8x1xf32>
    %119 = vector.broadcast %118 : vector<8x1xf32> to vector<8x8xf32>
    %120 = arith.mulf %115, %119 : vector<8x8xf32>
    %c1_57 = arith.constant 1 : index
    %c0_58 = arith.constant 0 : index
    %c16_59 = arith.constant 16 : index
    %121 = vector.load %arg3[%c1_57, %c0_58, %c16_59] : memref<2x8x32xf32, #tpu.memory_space<vmem>>, vector<1x8x8xf32>
    %122 = vector.shape_cast %121 : vector<1x8x8xf32> to vector<8x8xf32>
    %cst_60 = arith.constant dense<0.000000e+00> : vector<8x8xf32>
    %123 = tpu.matmul %120, %122, %cst_60 {dimension_numbers = #tpu.dot_dimension_numbers<[1], [0], [0], [1], [0, 0, 1, 1], [], []>} : vector<8x8xf32>, vector<8x8xf32>, vector<8x8xf32> -> vector<8x8xf32>
    %c1_61 = arith.constant 1 : index
    %c0_62 = arith.constant 0 : index
    %c16_63 = arith.constant 16 : index
    %124 = vector.load %arg4[%c1_61, %c0_62, %c16_63] : memref<2x8x32xf32, #tpu.memory_space<vmem>>, vector<1x8x8xf32>
    %125 = vector.shape_cast %124 : vector<1x8x8xf32> to vector<8x8xf32>
    %126 = vector.shape_cast %123 : vector<8x8xf32> to vector<1x8x8xf32>
    tpu.vector_store %arg4[%c1_61, %c0_62, %c16_63], %126 {strides = array<i32>} : memref<2x8x32xf32, #tpu.memory_space<vmem>>, vector<1x8x8xf32>,
    %127 = vector.extract_strided_slice %1 {offsets = [0, 24], sizes = [8, 8], strides = [1, 1]} : vector<8x32xf32> to vector<8x8xf32>
    %128 = vector.extract_strided_slice %3 {offsets = [0, 24], sizes = [16, 8], strides = [1, 1]} : vector<16x32xf32> to vector<16x8xf32>
    %cst_64 = arith.constant dense<0.000000e+00> : vector<8x16xf32>
    %129 = tpu.matmul %127, %128, %cst_64 {dimension_numbers = #tpu.dot_dimension_numbers<[1], [1], [0], [0], [0, 0, 1, 0], [], []>} : vector<8x8xf32>, vector<16x8xf32>, vector<8x16xf32> -> vector<8x16xf32>
    %130 = vector.extract_strided_slice %129 {offsets = [0, 0], sizes = [8, 8], strides = [1, 1]} : vector<8x16xf32> to vector<8x8xf32>
    %cst_65 = arith.constant dense<0xFF800000> : vector<8xf32>
    %131 = vector.multi_reduction <maximumf>, %130, %cst_65 [1] : vector<8x8xf32> to vector<8xf32>
    %132 = vector.shape_cast %131 : vector<8xf32> to vector<8x1xf32>
    %133 = vector.broadcast %132 : vector<8x1xf32> to vector<8x8xf32>
    %134 = arith.subf %130, %133 : vector<8x8xf32>
    %cst_66 = arith.constant 0.353553385 : f32
    %135 = vector.broadcast %cst_66 : f32 to vector<8x8xf32>
    %136 = arith.mulf %134, %135 : vector<8x8xf32>
    %137 = math.exp %136 : vector<8x8xf32>
    %cst_67 = arith.constant dense<0.000000e+00> : vector<8xf32>
    %138 = vector.multi_reduction <add>, %137, %cst_67 [1] : vector<8x8xf32> to vector<8xf32>
    %139 = vector.shape_cast %138 : vector<8xf32> to vector<8x1xf32>
    %140 = tpu.reciprocal %139 {approx = true} : vector<8x1xf32> -> vector<8x1xf32>
    %141 = vector.broadcast %140 : vector<8x1xf32> to vector<8x8xf32>
    %142 = arith.mulf %137, %141 : vector<8x8xf32>
    %c0_68 = arith.constant 0 : index
    %c0_69 = arith.constant 0 : index
    %c24 = arith.constant 24 : index
    %143 = vector.load %arg3[%c0_68, %c0_69, %c24] : memref<2x8x32xf32, #tpu.memory_space<vmem>>, vector<1x8x8xf32>
    %144 = vector.shape_cast %143 : vector<1x8x8xf32> to vector<8x8xf32>
    %cst_70 = arith.constant dense<0.000000e+00> : vector<8x8xf32>
    %145 = tpu.matmul %142, %144, %cst_70 {dimension_numbers = #tpu.dot_dimension_numbers<[1], [0], [0], [1], [0, 0, 1, 1], [], []>} : vector<8x8xf32>, vector<8x8xf32>, vector<8x8xf32> -> vector<8x8xf32>
    %c0_71 = arith.constant 0 : index
    %c0_72 = arith.constant 0 : index
    %c24_73 = arith.constant 24 : index
    %146 = vector.load %arg4[%c0_71, %c0_72, %c24_73] : memref<2x8x32xf32, #tpu.memory_space<vmem>>, vector<1x8x8xf32>
    %147 = vector.shape_cast %146 : vector<1x8x8xf32> to vector<8x8xf32>
    %148 = vector.shape_cast %145 : vector<8x8xf32> to vector<1x8x8xf32>
    tpu.vector_store %arg4[%c0_71, %c0_72, %c24_73], %148 {strides = array<i32>} : memref<2x8x32xf32, #tpu.memory_space<vmem>>, vector<1x8x8xf32>,
    %149 = vector.extract_strided_slice %129 {offsets = [0, 8], sizes = [8, 8], strides = [1, 1]} : vector<8x16xf32> to vector<8x8xf32>
    %cst_74 = arith.constant dense<0xFF800000> : vector<8xf32>
    %150 = vector.multi_reduction <maximumf>, %149, %cst_74 [1] : vector<8x8xf32> to vector<8xf32>
    %151 = vector.shape_cast %150 : vector<8xf32> to vector<8x1xf32>
    %152 = vector.broadcast %151 : vector<8x1xf32> to vector<8x8xf32>
    %153 = arith.subf %149, %152 : vector<8x8xf32>
    %cst_75 = arith.constant 0.353553385 : f32
    %154 = vector.broadcast %cst_75 : f32 to vector<8x8xf32>
    %155 = arith.mulf %153, %154 : vector<8x8xf32>
    %156 = math.exp %155 : vector<8x8xf32>
    %cst_76 = arith.constant dense<0.000000e+00> : vector<8xf32>
    %157 = vector.multi_reduction <add>, %156, %cst_76 [1] : vector<8x8xf32> to vector<8xf32>
    %158 = vector.shape_cast %157 : vector<8xf32> to vector<8x1xf32>
    %159 = tpu.reciprocal %158 {approx = true} : vector<8x1xf32> -> vector<8x1xf32>
    %160 = vector.broadcast %159 : vector<8x1xf32> to vector<8x8xf32>
    %161 = arith.mulf %156, %160 : vector<8x8xf32>
    %c1_77 = arith.constant 1 : index
    %c0_78 = arith.constant 0 : index
    %c24_79 = arith.constant 24 : index
    %162 = vector.load %arg3[%c1_77, %c0_78, %c24_79] : memref<2x8x32xf32, #tpu.memory_space<vmem>>, vector<1x8x8xf32>
    %163 = vector.shape_cast %162 : vector<1x8x8xf32> to vector<8x8xf32>
    %cst_80 = arith.constant dense<0.000000e+00> : vector<8x8xf32>
    %164 = tpu.matmul %161, %163, %cst_80 {dimension_numbers = #tpu.dot_dimension_numbers<[1], [0], [0], [1], [0, 0, 1, 1], [], []>} : vector<8x8xf32>, vector<8x8xf32>, vector<8x8xf32> -> vector<8x8xf32>
    %c1_81 = arith.constant 1 : index
    %c0_82 = arith.constant 0 : index
    %c24_83 = arith.constant 24 : index
    %165 = vector.load %arg4[%c1_81, %c0_82, %c24_83] : memref<2x8x32xf32, #tpu.memory_space<vmem>>, vector<1x8x8xf32>
    %166 = vector.shape_cast %165 : vector<1x8x8xf32> to vector<8x8xf32>
    %167 = vector.shape_cast %164 : vector<8x8xf32> to vector<1x8x8xf32>
    tpu.vector_store %arg4[%c1_81, %c0_82, %c24_83], %167 {strides = array<i32>} : memref<2x8x32xf32, #tpu.memory_space<vmem>>, vector<1x8x8xf32>,
    return
  }
  func.func @transform_0(%arg0: i32) -> (i32, i32, i32) {
    %c0_i32 = arith.constant 0 : i32
    %c0_i32_0 = arith.constant 0 : i32
    %c0_i32_1 = arith.constant 0 : i32
    %c0_i32_2 = arith.constant 0 : i32
    return %c0_i32, %c0_i32_0, %c0_i32_1 : i32, i32, i32
  }
  func.func @transform_1(%arg0: i32) -> (i32, i32, i32) {
    %c0_i32 = arith.constant 0 : i32
    %c0_i32_0 = arith.constant 0 : i32
    %c0_i32_1 = arith.constant 0 : i32
    return %arg0, %c0_i32, %c0_i32_0 : i32, i32, i32
  }
  func.func @transform_2(%arg0: i32) -> (i32, i32, i32) {
    %c0_i32 = arith.constant 0 : i32
    %c0_i32_0 = arith.constant 0 : i32
    %c0_i32_1 = arith.constant 0 : i32
    return %arg0, %c0_i32, %c0_i32_0 : i32, i32, i32
  }
  func.func @transform_3(%arg0: i32) -> (i32, i32, i32) {
    %c0_i32 = arith.constant 0 : i32
    %c0_i32_0 = arith.constant 0 : i32
    %c0_i32_1 = arith.constant 0 : i32
    return %arg0, %c0_i32, %c0_i32_0 : i32, i32, i32
  }
}

</mosaic_0001>

<llo_original>
// kernel: tpu_custom_call.1
$region0: #{tpu_custom_call.1}
  #allocation0 [shape = 'u32[]', space=smem, size = 0x4, offset = 0x4, fixed_abs, tag = 'smem constant byte address 0x4 - core index']
  #allocation1 [shape = 'u32[144,128]{1,0:T(1,128)}', space=vmem, size = 0x12000, scoped, tag = 'internal scratch']
  %s0 = inlined_call_operand.hbm [shape: f32[1,8,32], index: 0, kind: input, shape index: {}]
  %s1 = inlined_call_operand.hbm [shape: f32[2,8,32], index: 1, kind: input, shape index: {}]
  %s2 = inlined_call_operand.hbm [shape: f32[2,8,32], index: 2, kind: input, shape index: {}]
  %s3 = inlined_call_operand.hbm [shape: f32[2,8,32], index: 3, kind: output, shape index: {}]
  %s4 = sld [smem:[#allocation0]]
  $region34: #{tpu_custom_call.1} parent=0
    _
  %s6 = ssub.s32 1, %s4
  %s7 = scalar_select 0, %s6, %s4
  $region1: #{tpu_custom_call.1} parent=0
    #allocation2 [shape = 'u8[4096]{0}', space=vmem, size = 0x1000, scoped, tag = 'input window, operand 0, single buffered']
    #allocation3 [shape = 's32[1]{0}', space=sflag, size = 0x4, scoped, tag = 'scoped memory for tpu_custom_call.1']
    #allocation4 [shape = 's32[1]{0}', space=sflag, size = 0x4, scoped, tag = 'scoped memory for tpu_custom_call.1']
    #allocation5 [shape = 'u8[8192]{0}', space=vmem, size = 0x2000, scoped, tag = 'input window, operand 1, single buffered']
    #allocation6 [shape = 's32[1]{0}', space=sflag, size = 0x4, scoped, tag = 'scoped memory for tpu_custom_call.1']
    #allocation7 [shape = 'u8[8192]{0}', space=vmem, size = 0x2000, scoped, tag = 'input window, operand 2, single buffered']
    #allocation8 [shape = 'u8[8192]{0}', space=vmem, size = 0x2000, scoped, tag = 'output window, operand 0, single buffered']
    %8 = vsyncpa [#allocation3], 0
    %9 = vsyncpa [#allocation6], 0
    %10 = vsyncpa [#allocation4], 0
    // Predicated region
    $region2: #{tpu_custom_call.1} parent=1 // pred_check
      _
    $region3: #{tpu_custom_call.1} parent=1 // pred_check_branch
      %12 = sbr.rel (0) target = $region5
    $region4: #{tpu_custom_call.1} parent=1 // pred_region
      %s14 = ssub.s32 128, 128
      %15 = vsyncadd [#allocation3], %s14
      %s17 = sshll.u32 [#allocation2], 4
      %s18 = int_to_ptr.vmem [resolvable:$true] %s17
      %20 = dma.hbm_to_vmem [thread:$0]  %s0, 128, %s18, [#allocation3]
    $region5: #{tpu_custom_call.1} parent=1 // pred_fallthru
      _
    // Predicated region
    $region6: #{tpu_custom_call.1} parent=1 // pred_check
      _
    $region7: #{tpu_custom_call.1} parent=1 // pred_check_branch
      %22 = sbr.rel (0) target = $region9
    $region8: #{tpu_custom_call.1} parent=1 // pred_region
      %s24 = ssub.s32 256, 256
      %25 = vsyncadd [#allocation6], %s24
      %s26 = sshll.u32 [#allocation5], 4
      %s27 = int_to_ptr.vmem [resolvable:$true] %s26
      %32 = dma.hbm_to_vmem [thread:$0]  %s1, 256, %s27, [#allocation6], 128, 128, 8
    $region9: #{tpu_custom_call.1} parent=1 // pred_fallthru
      _
    // Predicated region
    $region10: #{tpu_custom_call.1} parent=1 // pred_check
      _
    $region11: #{tpu_custom_call.1} parent=1 // pred_check_branch
      %34 = sbr.rel (0) target = $region13
    $region12: #{tpu_custom_call.1} parent=1 // pred_region
      %s36 = ssub.s32 256, 256
      %37 = vsyncadd [#allocation6], %s36
      %s38 = sshll.u32 [#allocation7], 4
      %s39 = int_to_ptr.vmem [resolvable:$true] %s38
      %44 = dma.hbm_to_vmem [thread:$0]  %s2, 256, %s39, [#allocation6], 128, 128, 8
    $region13: #{tpu_custom_call.1} parent=1 // pred_fallthru
      _
    // Predicated region
    $region14: #{tpu_custom_call.1} parent=1 // pred_check
      _
    $region15: #{tpu_custom_call.1} parent=1 // pred_check_branch
      %46 = sbr.rel (0) target = $region17
    $region16: #{tpu_custom_call.1} parent=1 // pred_region
      %47 = dma.done [#allocation3], 128
    $region17: #{tpu_custom_call.1} parent=1 // pred_fallthru
      _
    // Predicated region
    $region18: #{tpu_custom_call.1} parent=1 // pred_check
      _
    $region19: #{tpu_custom_call.1} parent=1 // pred_check_branch
      %49 = sbr.rel (0) target = $region21
    $region20: #{tpu_custom_call.1} parent=1 // pred_region
      %50 = dma.done [#allocation6], 256
    $region21: #{tpu_custom_call.1} parent=1 // pred_fallthru
      _
    // Predicated region
    $region22: #{tpu_custom_call.1} parent=1 // pred_check
      _
    $region23: #{tpu_custom_call.1} parent=1 // pred_check_branch
      %52 = sbr.rel (0) target = $region25
    $region24: #{tpu_custom_call.1} parent=1 // pred_region
      %53 = dma.done [#allocation6], 256
    $region25: #{tpu_custom_call.1} parent=1 // pred_fallthru
      _
    %v54 = vld [vmem:[#allocation2] sm:$0xff]
    %v55 = vld [vmem:[#allocation5] sm:$0xff]
    %v56 = vld [vmem:[#allocation5 + $0x8] sm:$0xff]
    %vm57 = vcmask 64512
    %v59 = vsel %vm57, %v54, 0
    %v62 = vsel %vm57, %v55, 0
    %v65 = vsel %vm57, %v56, 0
    %67 = vmatprep.subr.mxu0 0.0
    %68 = vmatpush1.xpose.msra.mxu0 %v62
    %69 = vmatprep.subr.mxu0 0.0
    %70 = vmatpush1.xpose.msra.mxu0 %v65
    %71 = vmatprep.subr.mxu0 0.0
    %72 = vmatpush1.xpose.msra.mxu0 0.0
    %73 = vmatprep.subr.mxu0 0.0
    %74 = vmatpush1.xpose.msra.mxu0 0.0
    %75 = vmatprep.subr.mxu0 0.0
    %76 = vmatpush1.xpose.msra.mxu0 0.0
    %77 = vmatprep.subr.mxu0 0.0
    %78 = vmatpush1.xpose.msra.mxu0 0.0
    %79 = vmatprep.subr.mxu0 0.0
    %80 = vmatpush1.xpose.msra.mxu0 0.0
    %81 = vmatprep.subr.mxu0 0.0
    %82 = vmatpush1.xpose.msra.mxu0 0.0
    %83 = vmatprep.subr.mxu0 0.0
    %84 = vmatpush1.xpose.msra.mxu0 0.0
    %85 = vmatprep.subr.mxu0 0.0
    %86 = vmatpush1.xpose.msra.mxu0 0.0
    %87 = vmatprep.subr.mxu0 0.0
    %88 = vmatpush1.xpose.msra.mxu0 0.0
    %89 = vmatprep.subr.mxu0 0.0
    %90 = vmatpush1.xpose.msra.mxu0 0.0
    %91 = vmatprep.subr.mxu0 0.0
    %92 = vmatpush1.xpose.msra.mxu0 0.0
    %93 = vmatprep.subr.mxu0 0.0
    %94 = vmatpush1.xpose.msra.mxu0 0.0
    %95 = vmatprep.subr.mxu0 0.0
    %96 = vmatpush1.xpose.msra.mxu0 0.0
    %97 = vmatprep.subr.mxu0 0.0
    %98 = vmatpush1.xpose.msra.mxu0 0.0
    %99 = vmatprep.subr.mxu0 0.0
    %100 = vmatpush1.xpose.msra.mxu0 0.0
    %101 = vmatprep.subr.mxu0 0.0
    %102 = vmatpush1.xpose.msra.mxu0 0.0
    %103 = vmatprep.subr.mxu0 0.0
    %104 = vmatpush1.xpose.msra.mxu0 0.0
    %105 = vmatprep.subr.mxu0 0.0
    %106 = vmatpush1.xpose.msra.mxu0 0.0
    %107 = vmatprep.subr.mxu0 0.0
    %108 = vmatpush1.xpose.msra.mxu0 0.0
    %109 = vmatprep.subr.mxu0 0.0
    %110 = vmatpush1.xpose.msra.mxu0 0.0
    %111 = vmatprep.subr.mxu0 0.0
    %112 = vmatpush1.xpose.msra.mxu0 0.0
    %113 = vmatprep.subr.mxu0 0.0
    %114 = vmatpush1.xpose.msra.mxu0 0.0
    %115 = vmatprep.subr.mxu0 0.0
    %116 = vmatpush1.xpose.msra.mxu0 0.0
    %117 = vmatprep.subr.mxu0 0.0
    %118 = vmatpush1.xpose.msra.mxu0 0.0
    %119 = vmatprep.subr.mxu0 0.0
    %120 = vmatpush1.xpose.msra.mxu0 0.0
    %121 = vmatprep.subr.mxu0 0.0
    %122 = vmatpush1.xpose.msra.mxu0 0.0
    %123 = vmatprep.subr.mxu0 0.0
    %124 = vmatpush1.xpose.msra.mxu0 0.0
    %125 = vmatprep.subr.mxu0 0.0
    %126 = vmatpush1.xpose.msra.mxu0 0.0
    %127 = vmatprep.subr.mxu0 0.0
    %128 = vmatpush1.xpose.msra.mxu0 0.0
    %129 = vmatprep.subr.mxu0 0.0
    %130 = vmatpush1.xpose.msra.mxu0 0.0
    %131 = vmatprep.mubr.f32.mxu0 0.0
    %132 = vmatmul.mubr.f32.gmra.mrb[0].mxu0 %v59
    %v133 = vpop.f32.mrb[0].mxu0
    %v134 = vadd.f32 0.0, %v133
    %v135 = vpop.f32.mrb[0].mxu0
    %136 = vdwg.mxu0
    %v137 = vsel %vm57, %v134, -inf
    %138 = vmax.xlane.f32.xlu0 %v137
    %v139 = vpop.xlane.xlu0 %138
    %v140 = vsub.f32 %v134, %v139
    %v141 = vmul.f32 %v140, 0.35355338
    %v142 = vmul.f32 %v141, 1.442695
    %v143 = vpow.pop %v142
    %v144 = vsel %vm57, %v143, 0.0
    %145 = vadd.xlane.f32.xlu0 %v144
    %v146 = vpop.xlane.xlu0 %145
    %v147 = vrcp.pop %v146
    %v148 = vmul.f32 %v143, %v147
    %v149 = vld [vmem:[#allocation7] sm:$0xff]
    %v151 = vsel %vm57, %v148, 0
    %153 = vmatprep.subr.mxu0 0.0
    %154 = vmatpush1.msra.mxu0 %v149
    %155 = vmatprep.subr.mxu0 0.0
    %156 = vmatpush1.msra.mxu0 0.0
    %157 = vmatprep.subr.mxu0 0.0
    %158 = vmatpush1.msra.mxu0 0.0
    %159 = vmatprep.subr.mxu0 0.0
    %160 = vmatpush1.msra.mxu0 0.0
    %161 = vmatprep.subr.mxu0 0.0
    %162 = vmatpush1.msra.mxu0 0.0
    %163 = vmatprep.subr.mxu0 0.0
    %164 = vmatpush1.msra.mxu0 0.0
    %165 = vmatprep.subr.mxu0 0.0
    %166 = vmatpush1.msra.mxu0 0.0
    %167 = vmatprep.subr.mxu0 0.0
    %168 = vmatpush1.msra.mxu0 0.0
    %169 = vmatprep.subr.mxu0 0.0
    %170 = vmatpush1.msra.mxu0 0.0
    %171 = vmatprep.subr.mxu0 0.0
    %172 = vmatpush1.msra.mxu0 0.0
    %173 = vmatprep.subr.mxu0 0.0
    %174 = vmatpush1.msra.mxu0 0.0
    %175 = vmatprep.subr.mxu0 0.0
    %176 = vmatpush1.msra.mxu0 0.0
    %177 = vmatprep.subr.mxu0 0.0
    %178 = vmatpush1.msra.mxu0 0.0
    %179 = vmatprep.subr.mxu0 0.0
    %180 = vmatpush1.msra.mxu0 0.0
    %181 = vmatprep.subr.mxu0 0.0
    %182 = vmatpush1.msra.mxu0 0.0
    %183 = vmatprep.subr.mxu0 0.0
    %184 = vmatpush1.msra.mxu0 0.0
    %185 = vmatprep.subr.mxu0 0.0
    %186 = vmatpush1.msra.mxu0 0.0
    %187 = vmatprep.subr.mxu0 0.0
    %188 = vmatpush1.msra.mxu0 0.0
    %189 = vmatprep.subr.mxu0 0.0
    %190 = vmatpush1.msra.mxu0 0.0
    %191 = vmatprep.subr.mxu0 0.0
    %192 = vmatpush1.msra.mxu0 0.0
    %193 = vmatprep.subr.mxu0 0.0
    %194 = vmatpush1.msra.mxu0 0.0
    %195 = vmatprep.subr.mxu0 0.0
    %196 = vmatpush1.msra.mxu0 0.0
    %197 = vmatprep.subr.mxu0 0.0
    %198 = vmatpush1.msra.mxu0 0.0
    %199 = vmatprep.subr.mxu0 0.0
    %200 = vmatpush1.msra.mxu0 0.0
    %201 = vmatprep.subr.mxu0 0.0
    %202 = vmatpush1.msra.mxu0 0.0
    %203 = vmatprep.subr.mxu0 0.0
    %204 = vmatpush1.msra.mxu0 0.0
    %205 = vmatprep.subr.mxu0 0.0
    %206 = vmatpush1.msra.mxu0 0.0
    %207 = vmatprep.subr.mxu0 0.0
    %208 = vmatpush1.msra.mxu0 0.0
    %209 = vmatprep.subr.mxu0 0.0
    %210 = vmatpush1.msra.mxu0 0.0
    %211 = vmatprep.subr.mxu0 0.0
    %212 = vmatpush1.msra.mxu0 0.0
    %213 = vmatprep.subr.mxu0 0.0
    %214 = vmatpush1.msra.mxu0 0.0
    %215 = vmatprep.subr.mxu0 0.0
    %216 = vmatpush1.msra.mxu0 0.0
    %217 = vmatprep.mubr.f32.mxu0 0.0
    %218 = vmatmul.mubr.f32.gmra.mrb[0].mxu0 %v151
    %v219 = vpop.f32.mrb[0].mxu0
    %v220 = vadd.f32 0.0, %v219
    %v221 = vpop.f32.mrb[0].mxu0
    %222 = vdwg.mxu0
    %223 = vst.msk [vmem:[#allocation8] sm:$0xff] %vm57, %v220
    %vm224 = vcmask 130112
    %v225 = vsel %vm224, %v134, -inf
    %226 = vmax.xlane.f32.xlu0 %v225
    %v227 = vpop.xlane.xlu0 %226
    %v228 = vsub.f32 %v134, %v227
    %v229 = vmul.f32 %v228, 0.35355338
    %v230 = vmul.f32 %v229, 1.442695
    %v231 = vpow.pop %v230
    %233 = vrot.lane.b32.xlu0 %v231, 120
    %v234 = vpop.permute.xlu0 %233
    %v236 = vsel %vm57, %v234, 0.0
    %237 = vadd.xlane.f32.xlu0 %v236
    %v238 = vpop.xlane.xlu0 %237
    %v239 = vrcp.pop %v238
    %v240 = vmul.f32 %v231, %v239
    %s241 = scalar_lea.vmem [#allocation7], 8
    %v242 = vld [vmem:[%s241] sm:$0xff]
    %244 = vrot.lane.b32.xlu0 %v240, 120
    %v245 = vpop.permute.xlu0 %244
    %v246 = vsel %vm57, %v245, 0
    %248 = vmatprep.subr.mxu0 0.0
    %249 = vmatpush1.msra.mxu0 %v242
    %250 = vmatprep.subr.mxu0 0.0
    %251 = vmatpush1.msra.mxu0 0.0
    %252 = vmatprep.subr.mxu0 0.0
    %253 = vmatpush1.msra.mxu0 0.0
    %254 = vmatprep.subr.mxu0 0.0
    %255 = vmatpush1.msra.mxu0 0.0
    %256 = vmatprep.subr.mxu0 0.0
    %257 = vmatpush1.msra.mxu0 0.0
    %258 = vmatprep.subr.mxu0 0.0
    %259 = vmatpush1.msra.mxu0 0.0
    %260 = vmatprep.subr.mxu0 0.0
    %261 = vmatpush1.msra.mxu0 0.0
    %262 = vmatprep.subr.mxu0 0.0
    %263 = vmatpush1.msra.mxu0 0.0
    %264 = vmatprep.subr.mxu0 0.0
    %265 = vmatpush1.msra.mxu0 0.0
    %266 = vmatprep.subr.mxu0 0.0
    %267 = vmatpush1.msra.mxu0 0.0
    %268 = vmatprep.subr.mxu0 0.0
    %269 = vmatpush1.msra.mxu0 0.0
    %270 = vmatprep.subr.mxu0 0.0
    %271 = vmatpush1.msra.mxu0 0.0
    %272 = vmatprep.subr.mxu0 0.0
    %273 = vmatpush1.msra.mxu0 0.0
    %274 = vmatprep.subr.mxu0 0.0
    %275 = vmatpush1.msra.mxu0 0.0
    %276 = vmatprep.subr.mxu0 0.0
    %277 = vmatpush1.msra.mxu0 0.0
    %278 = vmatprep.subr.mxu0 0.0
    %279 = vmatpush1.msra.mxu0 0.0
    %280 = vmatprep.subr.mxu0 0.0
    %281 = vmatpush1.msra.mxu0 0.0
    %282 = vmatprep.subr.mxu0 0.0
    %283 = vmatpush1.msra.mxu0 0.0
    %284 = vmatprep.subr.mxu0 0.0
    %285 = vmatpush1.msra.mxu0 0.0
    %286 = vmatprep.subr.mxu0 0.0
    %287 = vmatpush1.msra.mxu0 0.0
    %288 = vmatprep.subr.mxu0 0.0
    %289 = vmatpush1.msra.mxu0 0.0
    %290 = vmatprep.subr.mxu0 0.0
    %291 = vmatpush1.msra.mxu0 0.0
    %292 = vmatprep.subr.mxu0 0.0
    %293 = vmatpush1.msra.mxu0 0.0
    %294 = vmatprep.subr.mxu0 0.0
    %295 = vmatpush1.msra.mxu0 0.0
    %296 = vmatprep.subr.mxu0 0.0
    %297 = vmatpush1.msra.mxu0 0.0
    %298 = vmatprep.subr.mxu0 0.0
    %299 = vmatpush1.msra.mxu0 0.0
    %300 = vmatprep.subr.mxu0 0.0
    %301 = vmatpush1.msra.mxu0 0.0
    %302 = vmatprep.subr.mxu0 0.0
    %303 = vmatpush1.msra.mxu0 0.0
    %304 = vmatprep.subr.mxu0 0.0
    %305 = vmatpush1.msra.mxu0 0.0
    %306 = vmatprep.subr.mxu0 0.0
    %307 = vmatpush1.msra.mxu0 0.0
    %308 = vmatprep.subr.mxu0 0.0
    %309 = vmatpush1.msra.mxu0 0.0
    %310 = vmatprep.subr.mxu0 0.0
    %311 = vmatpush1.msra.mxu0 0.0
    %312 = vmatprep.mubr.f32.mxu0 0.0
    %313 = vmatmul.mubr.f32.gmra.mrb[0].mxu0 %v246
    %v314 = vpop.f32.mrb[0].mxu0
    %v315 = vadd.f32 0.0, %v314
    %v316 = vpop.f32.mrb[0].mxu0
    %317 = vdwg.mxu0
    %s318 = scalar_lea.vmem [#allocation8], 8
    %319 = vst.msk [vmem:[%s318] sm:$0xff] %vm57, %v315
    %320 = vrot.lane.b32.xlu0 %v54, 120
    %v321 = vpop.permute.xlu0 %320
    %322 = vrot.lane.b32.xlu0 %v55, 120
    %v323 = vpop.permute.xlu0 %322
    %324 = vrot.lane.b32.xlu0 %v56, 120
    %v325 = vpop.permute.xlu0 %324
    %v326 = vsel %vm57, %v321, 0
    %v328 = vsel %vm57, %v323, 0
    %v330 = vsel %vm57, %v325, 0
    %332 = vmatprep.subr.mxu0 0.0
    %333 = vmatpush1.xpose.msra.mxu0 %v328
    %334 = vmatprep.subr.mxu0 0.0
    %335 = vmatpush1.xpose.msra.mxu0 %v330
    %336 = vmatprep.subr.mxu0 0.0
    %337 = vmatpush1.xpose.msra.mxu0 0.0
    %338 = vmatprep.subr.mxu0 0.0
    %339 = vmatpush1.xpose.msra.mxu0 0.0
    %340 = vmatprep.subr.mxu0 0.0
    %341 = vmatpush1.xpose.msra.mxu0 0.0
    %342 = vmatprep.subr.mxu0 0.0
    %343 = vmatpush1.xpose.msra.mxu0 0.0
    %344 = vmatprep.subr.mxu0 0.0
    %345 = vmatpush1.xpose.msra.mxu0 0.0
    %346 = vmatprep.subr.mxu0 0.0
    %347 = vmatpush1.xpose.msra.mxu0 0.0
    %348 = vmatprep.subr.mxu0 0.0
    %349 = vmatpush1.xpose.msra.mxu0 0.0
    %350 = vmatprep.subr.mxu0 0.0
    %351 = vmatpush1.xpose.msra.mxu0 0.0
    %352 = vmatprep.subr.mxu0 0.0
    %353 = vmatpush1.xpose.msra.mxu0 0.0
    %354 = vmatprep.subr.mxu0 0.0
    %355 = vmatpush1.xpose.msra.mxu0 0.0
    %356 = vmatprep.subr.mxu0 0.0
    %357 = vmatpush1.xpose.msra.mxu0 0.0
    %358 = vmatprep.subr.mxu0 0.0
    %359 = vmatpush1.xpose.msra.mxu0 0.0
    %360 = vmatprep.subr.mxu0 0.0
    %361 = vmatpush1.xpose.msra.mxu0 0.0
    %362 = vmatprep.subr.mxu0 0.0
    %363 = vmatpush1.xpose.msra.mxu0 0.0
    %364 = vmatprep.subr.mxu0 0.0
    %365 = vmatpush1.xpose.msra.mxu0 0.0
    %366 = vmatprep.subr.mxu0 0.0
    %367 = vmatpush1.xpose.msra.mxu0 0.0
    %368 = vmatprep.subr.mxu0 0.0
    %369 = vmatpush1.xpose.msra.mxu0 0.0
    %370 = vmatprep.subr.mxu0 0.0
    %371 = vmatpush1.xpose.msra.mxu0 0.0
    %372 = vmatprep.subr.mxu0 0.0
    %373 = vmatpush1.xpose.msra.mxu0 0.0
    %374 = vmatprep.subr.mxu0 0.0
    %375 = vmatpush1.xpose.msra.mxu0 0.0
    %376 = vmatprep.subr.mxu0 0.0
    %377 = vmatpush1.xpose.msra.mxu0 0.0
    %378 = vmatprep.subr.mxu0 0.0
    %379 = vmatpush1.xpose.msra.mxu0 0.0
    %380 = vmatprep.subr.mxu0 0.0
    %381 = vmatpush1.xpose.msra.mxu0 0.0
    %382 = vmatprep.subr.mxu0 0.0
    %383 = vmatpush1.xpose.msra.mxu0 0.0
    %384 = vmatprep.subr.mxu0 0.0
    %385 = vmatpush1.xpose.msra.mxu0 0.0
    %386 = vmatprep.subr.mxu0 0.0
    %387 = vmatpush1.xpose.msra.mxu0 0.0
    %388 = vmatprep.subr.mxu0 0.0
    %389 = vmatpush1.xpose.msra.mxu0 0.0
    %390 = vmatprep.subr.mxu0 0.0
    %391 = vmatpush1.xpose.msra.mxu0 0.0
    %392 = vmatprep.subr.mxu0 0.0
    %393 = vmatpush1.xpose.msra.mxu0 0.0
    %394 = vmatprep.subr.mxu0 0.0
    %395 = vmatpush1.xpose.msra.mxu0 0.0
    %396 = vmatprep.mubr.f32.mxu0 0.0
    %397 = vmatmul.mubr.f32.gmra.mrb[0].mxu0 %v326
    %v398 = vpop.f32.mrb[0].mxu0
    %v399 = vadd.f32 0.0, %v398
    %v400 = vpop.f32.mrb[0].mxu0
    %401 = vdwg.mxu0
    %v402 = vsel %vm57, %v399, -inf
    %403 = vmax.xlane.f32.xlu0 %v402
    %v404 = vpop.xlane.xlu0 %403
    %v405 = vsub.f32 %v399, %v404
    %v406 = vmul.f32 %v405, 0.35355338
    %v407 = vmul.f32 %v406, 1.442695
    %v408 = vpow.pop %v407
    %v409 = vsel %vm57, %v408, 0.0
    %410 = vadd.xlane.f32.xlu0 %v409
    %v411 = vpop.xlane.xlu0 %410
    %v412 = vrcp.pop %v411
    %v413 = vmul.f32 %v408, %v412
    %v414 = vld [vmem:[#allocation7] sm:$0xff]
    %416 = vrot.lane.b32.xlu0 %v414, 120
    %v417 = vpop.permute.xlu0 %416
    %v420 = vsel %vm57, %v413, 0
    %422 = vmatprep.subr.mxu0 0.0
    %423 = vmatpush1.msra.mxu0 %v417
    %424 = vmatprep.subr.mxu0 0.0
    %425 = vmatpush1.msra.mxu0 0.0
    %426 = vmatprep.subr.mxu0 0.0
    %427 = vmatpush1.msra.mxu0 0.0
    %428 = vmatprep.subr.mxu0 0.0
    %429 = vmatpush1.msra.mxu0 0.0
    %430 = vmatprep.subr.mxu0 0.0
    %431 = vmatpush1.msra.mxu0 0.0
    %432 = vmatprep.subr.mxu0 0.0
    %433 = vmatpush1.msra.mxu0 0.0
    %434 = vmatprep.subr.mxu0 0.0
    %435 = vmatpush1.msra.mxu0 0.0
    %436 = vmatprep.subr.mxu0 0.0
    %437 = vmatpush1.msra.mxu0 0.0
    %438 = vmatprep.subr.mxu0 0.0
    %439 = vmatpush1.msra.mxu0 0.0
    %440 = vmatprep.subr.mxu0 0.0
    %441 = vmatpush1.msra.mxu0 0.0
    %442 = vmatprep.subr.mxu0 0.0
    %443 = vmatpush1.msra.mxu0 0.0
    %444 = vmatprep.subr.mxu0 0.0
    %445 = vmatpush1.msra.mxu0 0.0
    %446 = vmatprep.subr.mxu0 0.0
    %447 = vmatpush1.msra.mxu0 0.0
    %448 = vmatprep.subr.mxu0 0.0
    %449 = vmatpush1.msra.mxu0 0.0
    %450 = vmatprep.subr.mxu0 0.0
    %451 = vmatpush1.msra.mxu0 0.0
    %452 = vmatprep.subr.mxu0 0.0
    %453 = vmatpush1.msra.mxu0 0.0
    %454 = vmatprep.subr.mxu0 0.0
    %455 = vmatpush1.msra.mxu0 0.0
    %456 = vmatprep.subr.mxu0 0.0
    %457 = vmatpush1.msra.mxu0 0.0
    %458 = vmatprep.subr.mxu0 0.0
    %459 = vmatpush1.msra.mxu0 0.0
    %460 = vmatprep.subr.mxu0 0.0
    %461 = vmatpush1.msra.mxu0 0.0
    %462 = vmatprep.subr.mxu0 0.0
    %463 = vmatpush1.msra.mxu0 0.0
    %464 = vmatprep.subr.mxu0 0.0
    %465 = vmatpush1.msra.mxu0 0.0
    %466 = vmatprep.subr.mxu0 0.0
    %467 = vmatpush1.msra.mxu0 0.0
    %468 = vmatprep.subr.mxu0 0.0
    %469 = vmatpush1.msra.mxu0 0.0
    %470 = vmatprep.subr.mxu0 0.0
    %471 = vmatpush1.msra.mxu0 0.0
    %472 = vmatprep.subr.mxu0 0.0
    %473 = vmatpush1.msra.mxu0 0.0
    %474 = vmatprep.subr.mxu0 0.0
    %475 = vmatpush1.msra.mxu0 0.0
    %476 = vmatprep.subr.mxu0 0.0
    %477 = vmatpush1.msra.mxu0 0.0
    %478 = vmatprep.subr.mxu0 0.0
    %479 = vmatpush1.msra.mxu0 0.0
    %480 = vmatprep.subr.mxu0 0.0
    %481 = vmatpush1.msra.mxu0 0.0
    %482 = vmatprep.subr.mxu0 0.0
    %483 = vmatpush1.msra.mxu0 0.0
    %484 = vmatprep.subr.mxu0 0.0
    %485 = vmatpush1.msra.mxu0 0.0
    %486 = vmatprep.mubr.f32.mxu0 0.0
    %487 = vmatmul.mubr.f32.gmra.mrb[0].mxu0 %v420
    %v488 = vpop.f32.mrb[0].mxu0
    %v489 = vadd.f32 0.0, %v488
    %v490 = vpop.f32.mrb[0].mxu0
    %491 = vdwg.mxu0
    %493 = vrot.lane.b32.xlu0 %v489, 8
    %v494 = vpop.permute.xlu0 %493
    %496 = vst.msk [vmem:[#allocation8] sm:$0xff] %vm224, %v494
    %v497 = vsel %vm224, %v399, -inf
    %498 = vmax.xlane.f32.xlu0 %v497
    %v499 = vpop.xlane.xlu0 %498
    %v500 = vsub.f32 %v399, %v499
    %v501 = vmul.f32 %v500, 0.35355338
    %v502 = vmul.f32 %v501, 1.442695
    %v503 = vpow.pop %v502
    %505 = vrot.lane.b32.xlu0 %v503, 120
    %v506 = vpop.permute.xlu0 %505
    %v508 = vsel %vm57, %v506, 0.0
    %509 = vadd.xlane.f32.xlu0 %v508
    %v510 = vpop.xlane.xlu0 %509
    %v511 = vrcp.pop %v510
    %v512 = vmul.f32 %v503, %v511
    %v513 = vld [vmem:[%s241] sm:$0xff]
    %515 = vrot.lane.b32.xlu0 %v512, 120
    %v516 = vpop.permute.xlu0 %515
    %518 = vrot.lane.b32.xlu0 %v513, 120
    %v519 = vpop.permute.xlu0 %518
    %v521 = vsel %vm57, %v516, 0
    %523 = vmatprep.subr.mxu0 0.0
    %524 = vmatpush1.msra.mxu0 %v519
    %525 = vmatprep.subr.mxu0 0.0
    %526 = vmatpush1.msra.mxu0 0.0
    %527 = vmatprep.subr.mxu0 0.0
    %528 = vmatpush1.msra.mxu0 0.0
    %529 = vmatprep.subr.mxu0 0.0
    %530 = vmatpush1.msra.mxu0 0.0
    %531 = vmatprep.subr.mxu0 0.0
    %532 = vmatpush1.msra.mxu0 0.0
    %533 = vmatprep.subr.mxu0 0.0
    %534 = vmatpush1.msra.mxu0 0.0
    %535 = vmatprep.subr.mxu0 0.0
    %536 = vmatpush1.msra.mxu0 0.0
    %537 = vmatprep.subr.mxu0 0.0
    %538 = vmatpush1.msra.mxu0 0.0
    %539 = vmatprep.subr.mxu0 0.0
    %540 = vmatpush1.msra.mxu0 0.0
    %541 = vmatprep.subr.mxu0 0.0
    %542 = vmatpush1.msra.mxu0 0.0
    %543 = vmatprep.subr.mxu0 0.0
    %544 = vmatpush1.msra.mxu0 0.0
    %545 = vmatprep.subr.mxu0 0.0
    %546 = vmatpush1.msra.mxu0 0.0
    %547 = vmatprep.subr.mxu0 0.0
    %548 = vmatpush1.msra.mxu0 0.0
    %549 = vmatprep.subr.mxu0 0.0
    %550 = vmatpush1.msra.mxu0 0.0
    %551 = vmatprep.subr.mxu0 0.0
    %552 = vmatpush1.msra.mxu0 0.0
    %553 = vmatprep.subr.mxu0 0.0
    %554 = vmatpush1.msra.mxu0 0.0
    %555 = vmatprep.subr.mxu0 0.0
    %556 = vmatpush1.msra.mxu0 0.0
    %557 = vmatprep.subr.mxu0 0.0
    %558 = vmatpush1.msra.mxu0 0.0
    %559 = vmatprep.subr.mxu0 0.0
    %560 = vmatpush1.msra.mxu0 0.0
    %561 = vmatprep.subr.mxu0 0.0
    %562 = vmatpush1.msra.mxu0 0.0
    %563 = vmatprep.subr.mxu0 0.0
    %564 = vmatpush1.msra.mxu0 0.0
    %565 = vmatprep.subr.mxu0 0.0
    %566 = vmatpush1.msra.mxu0 0.0
    %567 = vmatprep.subr.mxu0 0.0
    %568 = vmatpush1.msra.mxu0 0.0
    %569 = vmatprep.subr.mxu0 0.0
    %570 = vmatpush1.msra.mxu0 0.0
    %571 = vmatprep.subr.mxu0 0.0
    %572 = vmatpush1.msra.mxu0 0.0
    %573 = vmatprep.subr.mxu0 0.0
    %574 = vmatpush1.msra.mxu0 0.0
    %575 = vmatprep.subr.mxu0 0.0
    %576 = vmatpush1.msra.mxu0 0.0
    %577 = vmatprep.subr.mxu0 0.0
    %578 = vmatpush1.msra.mxu0 0.0
    %579 = vmatprep.subr.mxu0 0.0
    %580 = vmatpush1.msra.mxu0 0.0
    %581 = vmatprep.subr.mxu0 0.0
    %582 = vmatpush1.msra.mxu0 0.0
    %583 = vmatprep.subr.mxu0 0.0
    %584 = vmatpush1.msra.mxu0 0.0
    %585 = vmatprep.subr.mxu0 0.0
    %586 = vmatpush1.msra.mxu0 0.0
    %587 = vmatprep.mubr.f32.mxu0 0.0
    %588 = vmatmul.mubr.f32.gmra.mrb[0].mxu0 %v521
    %v589 = vpop.f32.mrb[0].mxu0
    %v590 = vadd.f32 0.0, %v589
    %v591 = vpop.f32.mrb[0].mxu0
    %592 = vdwg.mxu0
    %594 = vrot.lane.b32.xlu0 %v590, 8
    %v595 = vpop.permute.xlu0 %594
    %597 = vst.msk [vmem:[%s318] sm:$0xff] %vm224, %v595
    %598 = vrot.lane.b32.xlu0 %v54, 112
    %v599 = vpop.permute.xlu0 %598
    %600 = vrot.lane.b32.xlu0 %v55, 112
    %v601 = vpop.permute.xlu0 %600
    %602 = vrot.lane.b32.xlu0 %v56, 112
    %v603 = vpop.permute.xlu0 %602
    %v604 = vsel %vm57, %v599, 0
    %v606 = vsel %vm57, %v601, 0
    %v608 = vsel %vm57, %v603, 0
    %610 = vmatprep.subr.mxu0 0.0
    %611 = vmatpush1.xpose.msra.mxu0 %v606
    %612 = vmatprep.subr.mxu0 0.0
    %613 = vmatpush1.xpose.msra.mxu0 %v608
    %614 = vmatprep.subr.mxu0 0.0
    %615 = vmatpush1.xpose.msra.mxu0 0.0
    %616 = vmatprep.subr.mxu0 0.0
    %617 = vmatpush1.xpose.msra.mxu0 0.0
    %618 = vmatprep.subr.mxu0 0.0
    %619 = vmatpush1.xpose.msra.mxu0 0.0
    %620 = vmatprep.subr.mxu0 0.0
    %621 = vmatpush1.xpose.msra.mxu0 0.0
    %622 = vmatprep.subr.mxu0 0.0
    %623 = vmatpush1.xpose.msra.mxu0 0.0
    %624 = vmatprep.subr.mxu0 0.0
    %625 = vmatpush1.xpose.msra.mxu0 0.0
    %626 = vmatprep.subr.mxu0 0.0
    %627 = vmatpush1.xpose.msra.mxu0 0.0
    %628 = vmatprep.subr.mxu0 0.0
    %629 = vmatpush1.xpose.msra.mxu0 0.0
    %630 = vmatprep.subr.mxu0 0.0
    %631 = vmatpush1.xpose.msra.mxu0 0.0
    %632 = vmatprep.subr.mxu0 0.0
    %633 = vmatpush1.xpose.msra.mxu0 0.0
    %634 = vmatprep.subr.mxu0 0.0
    %635 = vmatpush1.xpose.msra.mxu0 0.0
    %636 = vmatprep.subr.mxu0 0.0
    %637 = vmatpush1.xpose.msra.mxu0 0.0
    %638 = vmatprep.subr.mxu0 0.0
    %639 = vmatpush1.xpose.msra.mxu0 0.0
    %640 = vmatprep.subr.mxu0 0.0
    %641 = vmatpush1.xpose.msra.mxu0 0.0
    %642 = vmatprep.subr.mxu0 0.0
    %643 = vmatpush1.xpose.msra.mxu0 0.0
    %644 = vmatprep.subr.mxu0 0.0
    %645 = vmatpush1.xpose.msra.mxu0 0.0
    %646 = vmatprep.subr.mxu0 0.0
    %647 = vmatpush1.xpose.msra.mxu0 0.0
    %648 = vmatprep.subr.mxu0 0.0
    %649 = vmatpush1.xpose.msra.mxu0 0.0
    %650 = vmatprep.subr.mxu0 0.0
    %651 = vmatpush1.xpose.msra.mxu0 0.0
    %652 = vmatprep.subr.mxu0 0.0
    %653 = vmatpush1.xpose.msra.mxu0 0.0
    %654 = vmatprep.subr.mxu0 0.0
    %655 = vmatpush1.xpose.msra.mxu0 0.0
    %656 = vmatprep.subr.mxu0 0.0
    %657 = vmatpush1.xpose.msra.mxu0 0.0
    %658 = vmatprep.subr.mxu0 0.0
    %659 = vmatpush1.xpose.msra.mxu0 0.0
    %660 = vmatprep.subr.mxu0 0.0
    %661 = vmatpush1.xpose.msra.mxu0 0.0
    %662 = vmatprep.subr.mxu0 0.0
    %663 = vmatpush1.xpose.msra.mxu0 0.0
    %664 = vmatprep.subr.mxu0 0.0
    %665 = vmatpush1.xpose.msra.mxu0 0.0
    %666 = vmatprep.subr.mxu0 0.0
    %667 = vmatpush1.xpose.msra.mxu0 0.0
    %668 = vmatprep.subr.mxu0 0.0
    %669 = vmatpush1.xpose.msra.mxu0 0.0
    %670 = vmatprep.subr.mxu0 0.0
    %671 = vmatpush1.xpose.msra.mxu0 0.0
    %672 = vmatprep.subr.mxu0 0.0
    %673 = vmatpush1.xpose.msra.mxu0 0.0
    %674 = vmatprep.mubr.f32.mxu0 0.0
    %675 = vmatmul.mubr.f32.gmra.mrb[0].mxu0 %v604
    %v676 = vpop.f32.mrb[0].mxu0
    %v677 = vadd.f32 0.0, %v676
    %v678 = vpop.f32.mrb[0].mxu0
    %679 = vdwg.mxu0
    %v680 = vsel %vm57, %v677, -inf
    %681 = vmax.xlane.f32.xlu0 %v680
    %v682 = vpop.xlane.xlu0 %681
    %v683 = vsub.f32 %v677, %v682
    %v684 = vmul.f32 %v683, 0.35355338
    %v685 = vmul.f32 %v684, 1.442695
    %v686 = vpow.pop %v685
    %v687 = vsel %vm57, %v686, 0.0
    %688 = vadd.xlane.f32.xlu0 %v687
    %v689 = vpop.xlane.xlu0 %688
    %v690 = vrcp.pop %v689
    %v691 = vmul.f32 %v686, %v690
    %v692 = vld [vmem:[#allocation7] sm:$0xff]
    %694 = vrot.lane.b32.xlu0 %v692, 112
    %v695 = vpop.permute.xlu0 %694
    %v698 = vsel %vm57, %v691, 0
    %700 = vmatprep.subr.mxu0 0.0
    %701 = vmatpush1.msra.mxu0 %v695
    %702 = vmatprep.subr.mxu0 0.0
    %703 = vmatpush1.msra.mxu0 0.0
    %704 = vmatprep.subr.mxu0 0.0
    %705 = vmatpush1.msra.mxu0 0.0
    %706 = vmatprep.subr.mxu0 0.0
    %707 = vmatpush1.msra.mxu0 0.0
    %708 = vmatprep.subr.mxu0 0.0
    %709 = vmatpush1.msra.mxu0 0.0
    %710 = vmatprep.subr.mxu0 0.0
    %711 = vmatpush1.msra.mxu0 0.0
    %712 = vmatprep.subr.mxu0 0.0
    %713 = vmatpush1.msra.mxu0 0.0
    %714 = vmatprep.subr.mxu0 0.0
    %715 = vmatpush1.msra.mxu0 0.0
    %716 = vmatprep.subr.mxu0 0.0
    %717 = vmatpush1.msra.mxu0 0.0
    %718 = vmatprep.subr.mxu0 0.0
    %719 = vmatpush1.msra.mxu0 0.0
    %720 = vmatprep.subr.mxu0 0.0
    %721 = vmatpush1.msra.mxu0 0.0
    %722 = vmatprep.subr.mxu0 0.0
    %723 = vmatpush1.msra.mxu0 0.0
    %724 = vmatprep.subr.mxu0 0.0
    %725 = vmatpush1.msra.mxu0 0.0
    %726 = vmatprep.subr.mxu0 0.0
    %727 = vmatpush1.msra.mxu0 0.0
    %728 = vmatprep.subr.mxu0 0.0
    %729 = vmatpush1.msra.mxu0 0.0
    %730 = vmatprep.subr.mxu0 0.0
    %731 = vmatpush1.msra.mxu0 0.0
    %732 = vmatprep.subr.mxu0 0.0
    %733 = vmatpush1.msra.mxu0 0.0
    %734 = vmatprep.subr.mxu0 0.0
    %735 = vmatpush1.msra.mxu0 0.0
    %736 = vmatprep.subr.mxu0 0.0
    %737 = vmatpush1.msra.mxu0 0.0
    %738 = vmatprep.subr.mxu0 0.0
    %739 = vmatpush1.msra.mxu0 0.0
    %740 = vmatprep.subr.mxu0 0.0
    %741 = vmatpush1.msra.mxu0 0.0
    %742 = vmatprep.subr.mxu0 0.0
    %743 = vmatpush1.msra.mxu0 0.0
    %744 = vmatprep.subr.mxu0 0.0
    %745 = vmatpush1.msra.mxu0 0.0
    %746 = vmatprep.subr.mxu0 0.0
    %747 = vmatpush1.msra.mxu0 0.0
    %748 = vmatprep.subr.mxu0 0.0
    %749 = vmatpush1.msra.mxu0 0.0
    %750 = vmatprep.subr.mxu0 0.0
    %751 = vmatpush1.msra.mxu0 0.0
    %752 = vmatprep.subr.mxu0 0.0
    %753 = vmatpush1.msra.mxu0 0.0
    %754 = vmatprep.subr.mxu0 0.0
    %755 = vmatpush1.msra.mxu0 0.0
    %756 = vmatprep.subr.mxu0 0.0
    %757 = vmatpush1.msra.mxu0 0.0
    %758 = vmatprep.subr.mxu0 0.0
    %759 = vmatpush1.msra.mxu0 0.0
    %760 = vmatprep.subr.mxu0 0.0
    %761 = vmatpush1.msra.mxu0 0.0
    %762 = vmatprep.subr.mxu0 0.0
    %763 = vmatpush1.msra.mxu0 0.0
    %764 = vmatprep.mubr.f32.mxu0 0.0
    %765 = vmatmul.mubr.f32.gmra.mrb[0].mxu0 %v698
    %v766 = vpop.f32.mrb[0].mxu0
    %v767 = vadd.f32 0.0, %v766
    %v768 = vpop.f32.mrb[0].mxu0
    %769 = vdwg.mxu0
    %771 = vrot.lane.b32.xlu0 %v767, 16
    %v772 = vpop.permute.xlu0 %771
    %vm774 = vcmask 195712
    %775 = vst.msk [vmem:[#allocation8] sm:$0xff] %vm774, %v772
    %v776 = vsel %vm224, %v677, -inf
    %777 = vmax.xlane.f32.xlu0 %v776
    %v778 = vpop.xlane.xlu0 %777
    %v779 = vsub.f32 %v677, %v778
    %v780 = vmul.f32 %v779, 0.35355338
    %v781 = vmul.f32 %v780, 1.442695
    %v782 = vpow.pop %v781
    %784 = vrot.lane.b32.xlu0 %v782, 120
    %v785 = vpop.permute.xlu0 %784
    %v787 = vsel %vm57, %v785, 0.0
    %788 = vadd.xlane.f32.xlu0 %v787
    %v789 = vpop.xlane.xlu0 %788
    %v790 = vrcp.pop %v789
    %v791 = vmul.f32 %v782, %v790
    %v792 = vld [vmem:[%s241] sm:$0xff]
    %794 = vrot.lane.b32.xlu0 %v791, 120
    %v795 = vpop.permute.xlu0 %794
    %797 = vrot.lane.b32.xlu0 %v792, 112
    %v798 = vpop.permute.xlu0 %797
    %v800 = vsel %vm57, %v795, 0
    %802 = vmatprep.subr.mxu0 0.0
    %803 = vmatpush1.msra.mxu0 %v798
    %804 = vmatprep.subr.mxu0 0.0
    %805 = vmatpush1.msra.mxu0 0.0
    %806 = vmatprep.subr.mxu0 0.0
    %807 = vmatpush1.msra.mxu0 0.0
    %808 = vmatprep.subr.mxu0 0.0
    %809 = vmatpush1.msra.mxu0 0.0
    %810 = vmatprep.subr.mxu0 0.0
    %811 = vmatpush1.msra.mxu0 0.0
    %812 = vmatprep.subr.mxu0 0.0
    %813 = vmatpush1.msra.mxu0 0.0
    %814 = vmatprep.subr.mxu0 0.0
    %815 = vmatpush1.msra.mxu0 0.0
    %816 = vmatprep.subr.mxu0 0.0
    %817 = vmatpush1.msra.mxu0 0.0
    %818 = vmatprep.subr.mxu0 0.0
    %819 = vmatpush1.msra.mxu0 0.0
    %820 = vmatprep.subr.mxu0 0.0
    %821 = vmatpush1.msra.mxu0 0.0
    %822 = vmatprep.subr.mxu0 0.0
    %823 = vmatpush1.msra.mxu0 0.0
    %824 = vmatprep.subr.mxu0 0.0
    %825 = vmatpush1.msra.mxu0 0.0
    %826 = vmatprep.subr.mxu0 0.0
    %827 = vmatpush1.msra.mxu0 0.0
    %828 = vmatprep.subr.mxu0 0.0
    %829 = vmatpush1.msra.mxu0 0.0
    %830 = vmatprep.subr.mxu0 0.0
    %831 = vmatpush1.msra.mxu0 0.0
    %832 = vmatprep.subr.mxu0 0.0
    %833 = vmatpush1.msra.mxu0 0.0
    %834 = vmatprep.subr.mxu0 0.0
    %835 = vmatpush1.msra.mxu0 0.0
    %836 = vmatprep.subr.mxu0 0.0
    %837 = vmatpush1.msra.mxu0 0.0
    %838 = vmatprep.subr.mxu0 0.0
    %839 = vmatpush1.msra.mxu0 0.0
    %840 = vmatprep.subr.mxu0 0.0
    %841 = vmatpush1.msra.mxu0 0.0
    %842 = vmatprep.subr.mxu0 0.0
    %843 = vmatpush1.msra.mxu0 0.0
    %844 = vmatprep.subr.mxu0 0.0
    %845 = vmatpush1.msra.mxu0 0.0
    %846 = vmatprep.subr.mxu0 0.0
    %847 = vmatpush1.msra.mxu0 0.0
    %848 = vmatprep.subr.mxu0 0.0
    %849 = vmatpush1.msra.mxu0 0.0
    %850 = vmatprep.subr.mxu0 0.0
    %851 = vmatpush1.msra.mxu0 0.0
    %852 = vmatprep.subr.mxu0 0.0
    %853 = vmatpush1.msra.mxu0 0.0
    %854 = vmatprep.subr.mxu0 0.0
    %855 = vmatpush1.msra.mxu0 0.0
    %856 = vmatprep.subr.mxu0 0.0
    %857 = vmatpush1.msra.mxu0 0.0
    %858 = vmatprep.subr.mxu0 0.0
    %859 = vmatpush1.msra.mxu0 0.0
    %860 = vmatprep.subr.mxu0 0.0
    %861 = vmatpush1.msra.mxu0 0.0
    %862 = vmatprep.subr.mxu0 0.0
    %863 = vmatpush1.msra.mxu0 0.0
    %864 = vmatprep.subr.mxu0 0.0
    %865 = vmatpush1.msra.mxu0 0.0
    %866 = vmatprep.mubr.f32.mxu0 0.0
    %867 = vmatmul.mubr.f32.gmra.mrb[0].mxu0 %v800
    %v868 = vpop.f32.mrb[0].mxu0
    %v869 = vadd.f32 0.0, %v868
    %v870 = vpop.f32.mrb[0].mxu0
    %871 = vdwg.mxu0
    %873 = vrot.lane.b32.xlu0 %v869, 16
    %v874 = vpop.permute.xlu0 %873
    %876 = vst.msk [vmem:[%s318] sm:$0xff] %vm774, %v874
    %877 = vrot.lane.b32.xlu0 %v54, 104
    %v878 = vpop.permute.xlu0 %877
    %879 = vrot.lane.b32.xlu0 %v55, 104
    %v880 = vpop.permute.xlu0 %879
    %881 = vrot.lane.b32.xlu0 %v56, 104
    %v882 = vpop.permute.xlu0 %881
    %v883 = vsel %vm57, %v878, 0
    %v885 = vsel %vm57, %v880, 0
    %v887 = vsel %vm57, %v882, 0
    %889 = vmatprep.subr.mxu0 0.0
    %890 = vmatpush1.xpose.msra.mxu0 %v885
    %891 = vmatprep.subr.mxu0 0.0
    %892 = vmatpush1.xpose.msra.mxu0 %v887
    %893 = vmatprep.subr.mxu0 0.0
    %894 = vmatpush1.xpose.msra.mxu0 0.0
    %895 = vmatprep.subr.mxu0 0.0
    %896 = vmatpush1.xpose.msra.mxu0 0.0
    %897 = vmatprep.subr.mxu0 0.0
    %898 = vmatpush1.xpose.msra.mxu0 0.0
    %899 = vmatprep.subr.mxu0 0.0
    %900 = vmatpush1.xpose.msra.mxu0 0.0
    %901 = vmatprep.subr.mxu0 0.0
    %902 = vmatpush1.xpose.msra.mxu0 0.0
    %903 = vmatprep.subr.mxu0 0.0
    %904 = vmatpush1.xpose.msra.mxu0 0.0
    %905 = vmatprep.subr.mxu0 0.0
    %906 = vmatpush1.xpose.msra.mxu0 0.0
    %907 = vmatprep.subr.mxu0 0.0
    %908 = vmatpush1.xpose.msra.mxu0 0.0
    %909 = vmatprep.subr.mxu0 0.0
    %910 = vmatpush1.xpose.msra.mxu0 0.0
    %911 = vmatprep.subr.mxu0 0.0
    %912 = vmatpush1.xpose.msra.mxu0 0.0
    %913 = vmatprep.subr.mxu0 0.0
    %914 = vmatpush1.xpose.msra.mxu0 0.0
    %915 = vmatprep.subr.mxu0 0.0
    %916 = vmatpush1.xpose.msra.mxu0 0.0
    %917 = vmatprep.subr.mxu0 0.0
    %918 = vmatpush1.xpose.msra.mxu0 0.0
    %919 = vmatprep.subr.mxu0 0.0
    %920 = vmatpush1.xpose.msra.mxu0 0.0
    %921 = vmatprep.subr.mxu0 0.0
    %922 = vmatpush1.xpose.msra.mxu0 0.0
    %923 = vmatprep.subr.mxu0 0.0
    %924 = vmatpush1.xpose.msra.mxu0 0.0
    %925 = vmatprep.subr.mxu0 0.0
    %926 = vmatpush1.xpose.msra.mxu0 0.0
    %927 = vmatprep.subr.mxu0 0.0
    %928 = vmatpush1.xpose.msra.mxu0 0.0
    %929 = vmatprep.subr.mxu0 0.0
    %930 = vmatpush1.xpose.msra.mxu0 0.0
    %931 = vmatprep.subr.mxu0 0.0
    %932 = vmatpush1.xpose.msra.mxu0 0.0
    %933 = vmatprep.subr.mxu0 0.0
    %934 = vmatpush1.xpose.msra.mxu0 0.0
    %935 = vmatprep.subr.mxu0 0.0
    %936 = vmatpush1.xpose.msra.mxu0 0.0
    %937 = vmatprep.subr.mxu0 0.0
    %938 = vmatpush1.xpose.msra.mxu0 0.0
    %939 = vmatprep.subr.mxu0 0.0
    %940 = vmatpush1.xpose.msra.mxu0 0.0
    %941 = vmatprep.subr.mxu0 0.0
    %942 = vmatpush1.xpose.msra.mxu0 0.0
    %943 = vmatprep.subr.mxu0 0.0
    %944 = vmatpush1.xpose.msra.mxu0 0.0
    %945 = vmatprep.subr.mxu0 0.0
    %946 = vmatpush1.xpose.msra.mxu0 0.0
    %947 = vmatprep.subr.mxu0 0.0
    %948 = vmatpush1.xpose.msra.mxu0 0.0
    %949 = vmatprep.subr.mxu0 0.0
    %950 = vmatpush1.xpose.msra.mxu0 0.0
    %951 = vmatprep.subr.mxu0 0.0
    %952 = vmatpush1.xpose.msra.mxu0 0.0
    %953 = vmatprep.mubr.f32.mxu0 0.0
    %954 = vmatmul.mubr.f32.gmra.mrb[0].mxu0 %v883
    %v955 = vpop.f32.mrb[0].mxu0
    %v956 = vadd.f32 0.0, %v955
    %v957 = vpop.f32.mrb[0].mxu0
    %958 = vdwg.mxu0
    %v959 = vsel %vm57, %v956, -inf
    %960 = vmax.xlane.f32.xlu0 %v959
    %v961 = vpop.xlane.xlu0 %960
    %v962 = vsub.f32 %v956, %v961
    %v963 = vmul.f32 %v962, 0.35355338
    %v964 = vmul.f32 %v963, 1.442695
    %v965 = vpow.pop %v964
    %v966 = vsel %vm57, %v965, 0.0
    %967 = vadd.xlane.f32.xlu0 %v966
    %v968 = vpop.xlane.xlu0 %967
    %v969 = vrcp.pop %v968
    %v970 = vmul.f32 %v965, %v969
    %v971 = vld [vmem:[#allocation7] sm:$0xff]
    %973 = vrot.lane.b32.xlu0 %v971, 104
    %v974 = vpop.permute.xlu0 %973
    %v977 = vsel %vm57, %v970, 0
    %979 = vmatprep.subr.mxu0 0.0
    %980 = vmatpush1.msra.mxu0 %v974
    %981 = vmatprep.subr.mxu0 0.0
    %982 = vmatpush1.msra.mxu0 0.0
    %983 = vmatprep.subr.mxu0 0.0
    %984 = vmatpush1.msra.mxu0 0.0
    %985 = vmatprep.subr.mxu0 0.0
    %986 = vmatpush1.msra.mxu0 0.0
    %987 = vmatprep.subr.mxu0 0.0
    %988 = vmatpush1.msra.mxu0 0.0
    %989 = vmatprep.subr.mxu0 0.0
    %990 = vmatpush1.msra.mxu0 0.0
    %991 = vmatprep.subr.mxu0 0.0
    %992 = vmatpush1.msra.mxu0 0.0
    %993 = vmatprep.subr.mxu0 0.0
    %994 = vmatpush1.msra.mxu0 0.0
    %995 = vmatprep.subr.mxu0 0.0
    %996 = vmatpush1.msra.mxu0 0.0
    %997 = vmatprep.subr.mxu0 0.0
    %998 = vmatpush1.msra.mxu0 0.0
    %999 = vmatprep.subr.mxu0 0.0
    %1000 = vmatpush1.msra.mxu0 0.0
    %1001 = vmatprep.subr.mxu0 0.0
    %1002 = vmatpush1.msra.mxu0 0.0
    %1003 = vmatprep.subr.mxu0 0.0
    %1004 = vmatpush1.msra.mxu0 0.0
    %1005 = vmatprep.subr.mxu0 0.0
    %1006 = vmatpush1.msra.mxu0 0.0
    %1007 = vmatprep.subr.mxu0 0.0
    %1008 = vmatpush1.msra.mxu0 0.0
    %1009 = vmatprep.subr.mxu0 0.0
    %1010 = vmatpush1.msra.mxu0 0.0
    %1011 = vmatprep.subr.mxu0 0.0
    %1012 = vmatpush1.msra.mxu0 0.0
    %1013 = vmatprep.subr.mxu0 0.0
    %1014 = vmatpush1.msra.mxu0 0.0
    %1015 = vmatprep.subr.mxu0 0.0
    %1016 = vmatpush1.msra.mxu0 0.0
    %1017 = vmatprep.subr.mxu0 0.0
    %1018 = vmatpush1.msra.mxu0 0.0
    %1019 = vmatprep.subr.mxu0 0.0
    %1020 = vmatpush1.msra.mxu0 0.0
    %1021 = vmatprep.subr.mxu0 0.0
    %1022 = vmatpush1.msra.mxu0 0.0
    %1023 = vmatprep.subr.mxu0 0.0
    %1024 = vmatpush1.msra.mxu0 0.0
    %1025 = vmatprep.subr.mxu0 0.0
    %1026 = vmatpush1.msra.mxu0 0.0
    %1027 = vmatprep.subr.mxu0 0.0
    %1028 = vmatpush1.msra.mxu0 0.0
    %1029 = vmatprep.subr.mxu0 0.0
    %1030 = vmatpush1.msra.mxu0 0.0
    %1031 = vmatprep.subr.mxu0 0.0
    %1032 = vmatpush1.msra.mxu0 0.0
    %1033 = vmatprep.subr.mxu0 0.0
    %1034 = vmatpush1.msra.mxu0 0.0
    %1035 = vmatprep.subr.mxu0 0.0
    %1036 = vmatpush1.msra.mxu0 0.0
    %1037 = vmatprep.subr.mxu0 0.0
    %1038 = vmatpush1.msra.mxu0 0.0
    %1039 = vmatprep.subr.mxu0 0.0
    %1040 = vmatpush1.msra.mxu0 0.0
    %1041 = vmatprep.subr.mxu0 0.0
    %1042 = vmatpush1.msra.mxu0 0.0
    %1043 = vmatprep.mubr.f32.mxu0 0.0
    %1044 = vmatmul.mubr.f32.gmra.mrb[0].mxu0 %v977
    %v1045 = vpop.f32.mrb[0].mxu0
    %v1046 = vadd.f32 0.0, %v1045
    %v1047 = vpop.f32.mrb[0].mxu0
    %1048 = vdwg.mxu0
    %1050 = vrot.lane.b32.xlu0 %v1046, 24
    %v1051 = vpop.permute.xlu0 %1050
    %vm1053 = vcmask 261312
    %1054 = vst.msk [vmem:[#allocation8] sm:$0xff] %vm1053, %v1051
    %v1055 = vsel %vm224, %v956, -inf
    %1056 = vmax.xlane.f32.xlu0 %v1055
    %v1057 = vpop.xlane.xlu0 %1056
    %v1058 = vsub.f32 %v956, %v1057
    %v1059 = vmul.f32 %v1058, 0.35355338
    %v1060 = vmul.f32 %v1059, 1.442695
    %v1061 = vpow.pop %v1060
    %1063 = vrot.lane.b32.xlu0 %v1061, 120
    %v1064 = vpop.permute.xlu0 %1063
    %v1066 = vsel %vm57, %v1064, 0.0
    %1067 = vadd.xlane.f32.xlu0 %v1066
    %v1068 = vpop.xlane.xlu0 %1067
    %v1069 = vrcp.pop %v1068
    %v1070 = vmul.f32 %v1061, %v1069
    %v1071 = vld [vmem:[%s241] sm:$0xff]
    %1073 = vrot.lane.b32.xlu0 %v1070, 120
    %v1074 = vpop.permute.xlu0 %1073
    %1076 = vrot.lane.b32.xlu0 %v1071, 104
    %v1077 = vpop.permute.xlu0 %1076
    %v1079 = vsel %vm57, %v1074, 0
    %1081 = vmatprep.subr.mxu0 0.0
    %1082 = vmatpush1.msra.mxu0 %v1077
    %1083 = vmatprep.subr.mxu0 0.0
    %1084 = vmatpush1.msra.mxu0 0.0
    %1085 = vmatprep.subr.mxu0 0.0
    %1086 = vmatpush1.msra.mxu0 0.0
    %1087 = vmatprep.subr.mxu0 0.0
    %1088 = vmatpush1.msra.mxu0 0.0
    %1089 = vmatprep.subr.mxu0 0.0
    %1090 = vmatpush1.msra.mxu0 0.0
    %1091 = vmatprep.subr.mxu0 0.0
    %1092 = vmatpush1.msra.mxu0 0.0
    %1093 = vmatprep.subr.mxu0 0.0
    %1094 = vmatpush1.msra.mxu0 0.0
    %1095 = vmatprep.subr.mxu0 0.0
    %1096 = vmatpush1.msra.mxu0 0.0
    %1097 = vmatprep.subr.mxu0 0.0
    %1098 = vmatpush1.msra.mxu0 0.0
    %1099 = vmatprep.subr.mxu0 0.0
    %1100 = vmatpush1.msra.mxu0 0.0
    %1101 = vmatprep.subr.mxu0 0.0
    %1102 = vmatpush1.msra.mxu0 0.0
    %1103 = vmatprep.subr.mxu0 0.0
    %1104 = vmatpush1.msra.mxu0 0.0
    %1105 = vmatprep.subr.mxu0 0.0
    %1106 = vmatpush1.msra.mxu0 0.0
    %1107 = vmatprep.subr.mxu0 0.0
    %1108 = vmatpush1.msra.mxu0 0.0
    %1109 = vmatprep.subr.mxu0 0.0
    %1110 = vmatpush1.msra.mxu0 0.0
    %1111 = vmatprep.subr.mxu0 0.0
    %1112 = vmatpush1.msra.mxu0 0.0
    %1113 = vmatprep.subr.mxu0 0.0
    %1114 = vmatpush1.msra.mxu0 0.0
    %1115 = vmatprep.subr.mxu0 0.0
    %1116 = vmatpush1.msra.mxu0 0.0
    %1117 = vmatprep.subr.mxu0 0.0
    %1118 = vmatpush1.msra.mxu0 0.0
    %1119 = vmatprep.subr.mxu0 0.0
    %1120 = vmatpush1.msra.mxu0 0.0
    %1121 = vmatprep.subr.mxu0 0.0
    %1122 = vmatpush1.msra.mxu0 0.0
    %1123 = vmatprep.subr.mxu0 0.0
    %1124 = vmatpush1.msra.mxu0 0.0
    %1125 = vmatprep.subr.mxu0 0.0
    %1126 = vmatpush1.msra.mxu0 0.0
    %1127 = vmatprep.subr.mxu0 0.0
    %1128 = vmatpush1.msra.mxu0 0.0
    %1129 = vmatprep.subr.mxu0 0.0
    %1130 = vmatpush1.msra.mxu0 0.0
    %1131 = vmatprep.subr.mxu0 0.0
    %1132 = vmatpush1.msra.mxu0 0.0
    %1133 = vmatprep.subr.mxu0 0.0
    %1134 = vmatpush1.msra.mxu0 0.0
    %1135 = vmatprep.subr.mxu0 0.0
    %1136 = vmatpush1.msra.mxu0 0.0
    %1137 = vmatprep.subr.mxu0 0.0
    %1138 = vmatpush1.msra.mxu0 0.0
    %1139 = vmatprep.subr.mxu0 0.0
    %1140 = vmatpush1.msra.mxu0 0.0
    %1141 = vmatprep.subr.mxu0 0.0
    %1142 = vmatpush1.msra.mxu0 0.0
    %1143 = vmatprep.subr.mxu0 0.0
    %1144 = vmatpush1.msra.mxu0 0.0
    %1145 = vmatprep.mubr.f32.mxu0 0.0
    %1146 = vmatmul.mubr.f32.gmra.mrb[0].mxu0 %v1079
    %v1147 = vpop.f32.mrb[0].mxu0
    %v1148 = vadd.f32 0.0, %v1147
    %v1149 = vpop.f32.mrb[0].mxu0
    %1150 = vdwg.mxu0
    %1152 = vrot.lane.b32.xlu0 %v1148, 24
    %v1153 = vpop.permute.xlu0 %1152
    %1155 = vst.msk [vmem:[%s318] sm:$0xff] %vm1053, %v1153
    // Predicated region
    $region26: #{tpu_custom_call.1} parent=1 // pred_check
      _
    $region27: #{tpu_custom_call.1} parent=1 // pred_check_branch
      %1157 = sbr.rel (0) target = $region29
    $region28: #{tpu_custom_call.1} parent=1 // pred_region
      %s1159 = ssub.s32 256, 256
      %1160 = vsyncadd [#allocation4], %s1159
      %s1161 = sshll.u32 [#allocation8], 4
      %s1162 = int_to_ptr.vmem [resolvable:$true] %s1161
      %1167 = dma.vmem_to_hbm [thread:$0]  %s1162, 256, %s3, [#allocation4], 128, 128, 8
    $region29: #{tpu_custom_call.1} parent=1 // pred_fallthru
      _
    // Predicated region
    $region30: #{tpu_custom_call.1} parent=1 // pred_check
      _
    $region31: #{tpu_custom_call.1} parent=1 // pred_check_branch
      %1169 = sbr.rel (0) target = $region33
    $region32: #{tpu_custom_call.1} parent=1 // pred_region
      %1170 = dma.done [#allocation4], 256
    $region33: #{tpu_custom_call.1} parent=1 // pred_fallthru
      _
    %1171 = vsyncpa [#allocation3], 1
    %1172 = vsyncpa [#allocation6], 1
    %1173 = vsyncpa [#allocation4], 1

</llo_original>
